<compile_context>
chip_gen: v7x
topology: tpu7x:2x2x1
jax: 0.10.0
libtpu: 0.0.40
codegen_flags: <defaults>
</compile_context>

<pallas_src>
import functools

import jax
import jax.numpy as jnp
from jax.experimental import pallas as pl
from jax.experimental.pallas import tpu as pltpu

_LANE = 128
_SUB = 8


def _round_up(x, m):
    return (x + m - 1) // m * m


def _dqn_kernel(x_ref,
                w1_ref, b1_ref,
                wva_ref, bva_ref,
                wv2_ref, bv2_ref,
                wa2_ref, ba2_ref,
                q_ref,
                *, inv_n_actions, branch_width):
    # fc1 + ReLU  (bf16 operands on the MXU, f32 accumulation, f32 VPU math)
    x = x_ref[...]
    h = jnp.dot(x.astype(jnp.bfloat16), w1_ref[...],
                preferred_element_type=jnp.float32) + b1_ref[...]
    h = jnp.maximum(h, 0.0)

    # fused fc_value | fc_advantage first layers: one (256 -> 512) matmul + ReLU
    hva = jnp.dot(h.astype(jnp.bfloat16), wva_ref[...],
                  preferred_element_type=jnp.float32) + bva_ref[...]
    hva = jnp.maximum(hva, 0.0)
    hv = hva[:, :branch_width]          # value branch activations   (B, 256)
    ha = hva[:, branch_width:]          # advantage branch activations (B, 256)

    # value head (single output column): VPU multiply + cross-lane reduction
    # instead of a wasteful 1-column MXU matmul.
    v = jnp.sum(hv * wv2_ref[...], axis=1, keepdims=True) + bv2_ref[...]

    # advantage head, lane-padded to 128 outputs (padded columns are exactly 0).
    a = jnp.dot(ha.astype(jnp.bfloat16), wa2_ref[...],
                preferred_element_type=jnp.float32) + ba2_ref[...]

    # dueling combine: padded columns contribute 0 to the sum, so a full-lane
    # sum times the precomputed 1/n_actions equals the mean over real actions.
    a_mean = jnp.sum(a, axis=1, keepdims=True) * inv_n_actions
    q_ref[...] = v + a - a_mean


def pack_params(params, input_size, hidden_size):
    """Fuse / pad / bf16-cast the raw (in,out)-layout params for the kernel."""
    (w1, b1, wv1, bv1, wv2, bv2, wa1, ba1, wa2, ba2) = params
    k_pad = _round_up(max(input_size, _LANE), _LANE)     # fc1 contraction pad
    a_pad = _round_up(max(hidden_size, _LANE), _LANE)    # lane-dense output pad

    # fc1 weight: zero-pad contraction dim to k_pad
    w1p = jnp.zeros((k_pad, w1.shape[1]), jnp.float32).at[:input_size, :].set(w1)
    # fuse value/advantage first layers side by side
    wva = jnp.concatenate([wv1, wa1], axis=1)            # (256, 512)
    bva = jnp.concatenate([bv1, ba1], axis=1)            # (1, 512)
    # advantage head: zero-pad output columns to a_pad
    wa2p = jnp.zeros((wa2.shape[0], a_pad), jnp.float32).at[:, :hidden_size].set(wa2)
    ba2p = jnp.zeros((1, a_pad), jnp.float32).at[:, :hidden_size].set(ba2)

    return (
        w1p.astype(jnp.bfloat16), b1,                    # fc1
        wva.astype(jnp.bfloat16), bva,                   # fused value|adv layer 1
        wv2.reshape(1, -1), bv2.reshape(1, 1),           # value head (f32 row, VPU)
        wa2p.astype(jnp.bfloat16), ba2p,                 # advantage head (padded)
    )


def dqn_forward(x, packed, *, hidden_size):
    """Dueling-DQN forward, one Pallas kernel, batch-tiled grid."""
    (w1, b1, wva, bva, wv2, bv2, wa2, ba2) = packed
    batch = x.shape[0]
    k_pad = w1.shape[0]
    a_pad = wa2.shape[1]
    branch = wv2.shape[1]

    tile_b = _LANE if batch >= _LANE else _round_up(batch, _SUB)
    b_pad = _round_up(batch, tile_b)

    # pad batch rows and feature (contraction) columns with zeros
    xp = jnp.zeros((b_pad, k_pad), jnp.float32).at[:batch, :x.shape[1]].set(x)

    kernel = functools.partial(_dqn_kernel,
                               inv_n_actions=1.0 / hidden_size,
                               branch_width=branch)

    def resident(arr):
        # weights/biases: same block every grid step -> stay resident in VMEM
        return pl.BlockSpec(arr.shape, lambda i: (0, 0))

    q_pad = pl.pallas_call(
        kernel,
        out_shape=jax.ShapeDtypeStruct((b_pad, a_pad), jnp.float32),
        grid=(b_pad // tile_b,),
        in_specs=[
            pl.BlockSpec((tile_b, k_pad), lambda i: (i, 0)),   # x batch tile
            resident(w1), resident(b1),
            resident(wva), resident(bva),
            resident(wv2), resident(bv2),
            resident(wa2), resident(ba2),
        ],
        out_specs=pl.BlockSpec((tile_b, a_pad), lambda i: (i, 0)),
        compiler_params=pltpu.CompilerParams(
            dimension_semantics=("parallel",)),
    )(xp, w1, b1, wva, bva, wv2, bv2, wa2, ba2)

    return q_pad[:batch, :hidden_size]


def init_params(key, input_size, hidden_size, output_size=256):
    """Deterministic synthetic init. Weights stored as (in, out); biases as (1, out)."""
    def linear(k, fan_in, fan_out):
        kw, kb = jax.random.split(k)
        bound = 1.0 / jnp.sqrt(fan_in)
        w = jax.random.uniform(kw, (fan_in, fan_out), jnp.float32, -bound, bound)
        b = jax.random.uniform(kb, (1, fan_out), jnp.float32, -bound, bound)
        return w, b

    k1, k2, k3, k4, k5 = jax.random.split(key, 5)
    w1, b1 = linear(k1, input_size, output_size)        # fc1
    wv1, bv1 = linear(k2, output_size, 256)             # fc_value
    wv2, bv2 = linear(k3, 256, 1)                       # value
    wa1, ba1 = linear(k4, output_size, 256)             # fc_advantage
    wa2, ba2 = linear(k5, 256, hidden_size)             # advantages
    return (w1, b1, wv1, bv1, wv2, bv2, wa1, ba1, wa2, ba2)


def dqn_reference(x, params):
    """Plain-JAX reference matching the PyTorch forward."""
    (w1, b1, wv1, bv1, wv2, bv2, wa1, ba1, wa2, ba2) = params
    h = jax.nn.relu(x @ w1 + b1)
    hv = jax.nn.relu(h @ wv1 + bv1)
    v = hv @ wv2 + bv2
    ha = jax.nn.relu(h @ wa1 + ba1)
    a = ha @ wa2 + ba2
    return v + a - jnp.mean(a, axis=1, keepdims=True)


if __name__ == "__main__":
    input_size = 32     # state dimension
    hidden_size = 16    # number of actions
    output_size = 256
    batch = 256         # two 128-row batch tiles -> exercises the grid

    key = jax.random.PRNGKey(0)
    kx, kp = jax.random.split(key)
    x = jax.random.normal(kx, (batch, input_size), dtype=jnp.float32)
    params = init_params(kp, input_size, hidden_size, output_size)
    packed = pack_params(params, input_size, hidden_size)

    fwd = jax.jit(functools.partial(dqn_forward, hidden_size=hidden_size))
    q = jax.block_until_ready(fwd(x, packed))

    # Reference with the same bf16-rounded MXU weights (value-head weight stays
    # f32, as in the kernel), so the comparison isolates kernel-side error.
    def rb(p):
        return p.astype(jnp.bfloat16).astype(jnp.float32)
    (w1, b1, wv1, bv1, wv2, bv2, wa1, ba1, wa2, ba2) = params
    params_rounded = (rb(w1), b1, rb(wv1), bv1, wv2, bv2, rb(wa1), ba1, rb(wa2), ba2)
    q_ref = dqn_reference(x, params_rounded)

    assert q.shape == (batch, hidden_size)
    assert jnp.allclose(q, q_ref, atol=2e-2, rtol=2e-2), \
        float(jnp.max(jnp.abs(q - q_ref)))

    print("KERNEL_OK")
</pallas_src>

<mosaic_0001>
module attributes {stable_mosaic.version = 11 : i64} {
  func.func @_dqn_kernel(%arg0: i32, %arg1: memref<128x128xf32, #tpu.memory_space<vmem>>, %arg2: memref<128x256xbf16, #tpu.memory_space<vmem>>, %arg3: memref<1x256xf32, #tpu.memory_space<vmem>>, %arg4: memref<256x512xbf16, #tpu.memory_space<vmem>>, %arg5: memref<1x512xf32, #tpu.memory_space<vmem>>, %arg6: memref<1x256xf32, #tpu.memory_space<vmem>>, %arg7: memref<1x1xf32, #tpu.memory_space<vmem>>, %arg8: memref<256x128xbf16, #tpu.memory_space<vmem>>, %arg9: memref<1x128xf32, #tpu.memory_space<vmem>>, %arg10: memref<128x128xf32, #tpu.memory_space<vmem>>) attributes {dimension_semantics = [#tpu.dimension_semantics<parallel>], iteration_bounds = array<i64: 2>, scalar_prefetch = 0 : i64, scratch_operands = 0 : i64, tpu.core_type = #tpu.core_type<tc>, window_params = [{transform_indices = @transform_0, window_bounds = array<i64: 128, 128>}, {pipeline_mode = #tpu.pipeline_mode<synchronous>, transform_indices = @transform_1, window_bounds = array<i64: 128, 256>}, {pipeline_mode = #tpu.pipeline_mode<synchronous>, transform_indices = @transform_2, window_bounds = array<i64: 1, 256>}, {pipeline_mode = #tpu.pipeline_mode<synchronous>, transform_indices = @transform_3, window_bounds = array<i64: 256, 512>}, {pipeline_mode = #tpu.pipeline_mode<synchronous>, transform_indices = @transform_4, window_bounds = array<i64: 1, 512>}, {pipeline_mode = #tpu.pipeline_mode<synchronous>, transform_indices = @transform_5, window_bounds = array<i64: 1, 256>}, {pipeline_mode = #tpu.pipeline_mode<synchronous>, transform_indices = @transform_6, window_bounds = array<i64: 1, 1>}, {pipeline_mode = #tpu.pipeline_mode<synchronous>, transform_indices = @transform_7, window_bounds = array<i64: 256, 128>}, {pipeline_mode = #tpu.pipeline_mode<synchronous>, transform_indices = @transform_8, window_bounds = array<i64: 1, 128>}, {transform_indices = @transform_9, window_bounds = array<i64: 128, 128>}]} {
    %c0 = arith.constant 0 : index
    %c0_0 = arith.constant 0 : index
    %0 = vector.load %arg1[%c0, %c0_0] : memref<128x128xf32, #tpu.memory_space<vmem>>, vector<128x128xf32>
    %1 = arith.truncf %0 : vector<128x128xf32> to vector<128x128xbf16>
    %c0_1 = arith.constant 0 : index
    %c0_2 = arith.constant 0 : index
    %2 = vector.load %arg2[%c0_1, %c0_2] : memref<128x256xbf16, #tpu.memory_space<vmem>>, vector<128x256xbf16>
    %cst = arith.constant dense<0.000000e+00> : vector<128x256xf32>
    %3 = tpu.matmul %1, %2, %cst {dimension_numbers = #tpu.dot_dimension_numbers<[1], [0], [0], [1], [0, 0, 1, 1], [], []>} : vector<128x128xbf16>, vector<128x256xbf16>, vector<128x256xf32> -> vector<128x256xf32>
    %c0_3 = arith.constant 0 : index
    %c0_4 = arith.constant 0 : index
    %4 = vector.load %arg3[%c0_3, %c0_4] : memref<1x256xf32, #tpu.memory_space<vmem>>, vector<1x256xf32>
    %5 = vector.broadcast %4 : vector<1x256xf32> to vector<128x256xf32>
    %6 = arith.addf %3, %5 : vector<128x256xf32>
    %cst_5 = arith.constant 0.000000e+00 : f32
    %7 = vector.broadcast %cst_5 : f32 to vector<128x256xf32>
    %8 = arith.maximumf %6, %7 : vector<128x256xf32>
    %9 = arith.truncf %8 : vector<128x256xf32> to vector<128x256xbf16>
    %c0_6 = arith.constant 0 : index
    %c0_7 = arith.constant 0 : index
    %10 = vector.load %arg4[%c0_6, %c0_7] : memref<256x512xbf16, #tpu.memory_space<vmem>>, vector<256x512xbf16>
    %cst_8 = arith.constant dense<0.000000e+00> : vector<128x512xf32>
    %11 = tpu.matmul %9, %10, %cst_8 {dimension_numbers = #tpu.dot_dimension_numbers<[1], [0], [0], [1], [0, 0, 1, 1], [], []>} : vector<128x256xbf16>, vector<256x512xbf16>, vector<128x512xf32> -> vector<128x512xf32>
    %c0_9 = arith.constant 0 : index
    %c0_10 = arith.constant 0 : index
    %12 = vector.load %arg5[%c0_9, %c0_10] : memref<1x512xf32, #tpu.memory_space<vmem>>, vector<1x512xf32>
    %13 = vector.broadcast %12 : vector<1x512xf32> to vector<128x512xf32>
    %14 = arith.addf %11, %13 : vector<128x512xf32>
    %cst_11 = arith.constant 0.000000e+00 : f32
    %15 = vector.broadcast %cst_11 : f32 to vector<128x512xf32>
    %16 = arith.maximumf %14, %15 : vector<128x512xf32>
    %17 = vector.extract_strided_slice %16 {offsets = [0, 0], sizes = [128, 256], strides = [1, 1]} : vector<128x512xf32> to vector<128x256xf32>
    %18 = vector.extract_strided_slice %16 {offsets = [0, 256], sizes = [128, 256], strides = [1, 1]} : vector<128x512xf32> to vector<128x256xf32>
    %c0_12 = arith.constant 0 : index
    %c0_13 = arith.constant 0 : index
    %19 = vector.load %arg6[%c0_12, %c0_13] : memref<1x256xf32, #tpu.memory_space<vmem>>, vector<1x256xf32>
    %20 = vector.broadcast %19 : vector<1x256xf32> to vector<128x256xf32>
    %21 = arith.mulf %17, %20 : vector<128x256xf32>
    %cst_14 = arith.constant dense<0.000000e+00> : vector<128xf32>
    %22 = vector.multi_reduction <add>, %21, %cst_14 [1] : vector<128x256xf32> to vector<128xf32>
    %23 = vector.shape_cast %22 : vector<128xf32> to vector<128x1xf32>
    %c0_15 = arith.constant 0 : index
    %c0_16 = arith.constant 0 : index
    %24 = vector.load %arg7[%c0_15, %c0_16] : memref<1x1xf32, #tpu.memory_space<vmem>>, vector<1x1xf32>
    %25 = vector.broadcast %24 : vector<1x1xf32> to vector<128x1xf32>
    %26 = arith.addf %23, %25 : vector<128x1xf32>
    %27 = arith.truncf %18 : vector<128x256xf32> to vector<128x256xbf16>
    %c0_17 = arith.constant 0 : index
    %c0_18 = arith.constant 0 : index
    %28 = vector.load %arg8[%c0_17, %c0_18] : memref<256x128xbf16, #tpu.memory_space<vmem>>, vector<256x128xbf16>
    %cst_19 = arith.constant dense<0.000000e+00> : vector<128x128xf32>
    %29 = tpu.matmul %27, %28, %cst_19 {dimension_numbers = #tpu.dot_dimension_numbers<[1], [0], [0], [1], [0, 0, 1, 1], [], []>} : vector<128x256xbf16>, vector<256x128xbf16>, vector<128x128xf32> -> vector<128x128xf32>
    %c0_20 = arith.constant 0 : index
    %c0_21 = arith.constant 0 : index
    %30 = vector.load %arg9[%c0_20, %c0_21] : memref<1x128xf32, #tpu.memory_space<vmem>>, vector<1x128xf32>
    %31 = vector.broadcast %30 : vector<1x128xf32> to vector<128x128xf32>
    %32 = arith.addf %29, %31 : vector<128x128xf32>
    %cst_22 = arith.constant dense<0.000000e+00> : vector<128xf32>
    %33 = vector.multi_reduction <add>, %32, %cst_22 [1] : vector<128x128xf32> to vector<128xf32>
    %34 = vector.shape_cast %33 : vector<128xf32> to vector<128x1xf32>
    %cst_23 = arith.constant 6.250000e-02 : f32
    %35 = vector.broadcast %cst_23 : f32 to vector<128x1xf32>
    %36 = arith.mulf %34, %35 : vector<128x1xf32>
    %37 = vector.broadcast %26 : vector<128x1xf32> to vector<128x128xf32>
    %38 = arith.addf %37, %32 : vector<128x128xf32>
    %39 = vector.broadcast %36 : vector<128x1xf32> to vector<128x128xf32>
    %40 = arith.subf %38, %39 : vector<128x128xf32>
    %c0_24 = arith.constant 0 : index
    %c0_25 = arith.constant 0 : index
    %41 = vector.load %arg10[%c0_24, %c0_25] : memref<128x128xf32, #tpu.memory_space<vmem>>, vector<128x128xf32>
    tpu.vector_store %arg10[%c0_24, %c0_25], %40 {strides = array<i32>} : memref<128x128xf32, #tpu.memory_space<vmem>>, vector<128x128xf32>,
    return
  }
  func.func @transform_0(%arg0: i32) -> (i32, i32) {
    %c0_i32 = arith.constant 0 : i32
    %c0_i32_0 = arith.constant 0 : i32
    return %arg0, %c0_i32 : i32, i32
  }
  func.func @transform_1(%arg0: i32) -> (i32, i32) {
    %c0_i32 = arith.constant 0 : i32
    %c0_i32_0 = arith.constant 0 : i32
    %c0_i32_1 = arith.constant 0 : i32
    return %c0_i32, %c0_i32_0 : i32, i32
  }
  func.func @transform_2(%arg0: i32) -> (i32, i32) {
    %c0_i32 = arith.constant 0 : i32
    %c0_i32_0 = arith.constant 0 : i32
    %c0_i32_1 = arith.constant 0 : i32
    return %c0_i32, %c0_i32_0 : i32, i32
  }
  func.func @transform_3(%arg0: i32) -> (i32, i32) {
    %c0_i32 = arith.constant 0 : i32
    %c0_i32_0 = arith.constant 0 : i32
    %c0_i32_1 = arith.constant 0 : i32
    return %c0_i32, %c0_i32_0 : i32, i32
  }
  func.func @transform_4(%arg0: i32) -> (i32, i32) {
    %c0_i32 = arith.constant 0 : i32
    %c0_i32_0 = arith.constant 0 : i32
    %c0_i32_1 = arith.constant 0 : i32
    return %c0_i32, %c0_i32_0 : i32, i32
  }
  func.func @transform_5(%arg0: i32) -> (i32, i32) {
    %c0_i32 = arith.constant 0 : i32
    %c0_i32_0 = arith.constant 0 : i32
    %c0_i32_1 = arith.constant 0 : i32
    return %c0_i32, %c0_i32_0 : i32, i32
  }
  func.func @transform_6(%arg0: i32) -> (i32, i32) {
    %c0_i32 = arith.constant 0 : i32
    %c0_i32_0 = arith.constant 0 : i32
    %c0_i32_1 = arith.constant 0 : i32
    return %c0_i32, %c0_i32_0 : i32, i32
  }
  func.func @transform_7(%arg0: i32) -> (i32, i32) {
    %c0_i32 = arith.constant 0 : i32
    %c0_i32_0 = arith.constant 0 : i32
    %c0_i32_1 = arith.constant 0 : i32
    return %c0_i32, %c0_i32_0 : i32, i32
  }
  func.func @transform_8(%arg0: i32) -> (i32, i32) {
    %c0_i32 = arith.constant 0 : i32
    %c0_i32_0 = arith.constant 0 : i32
    %c0_i32_1 = arith.constant 0 : i32
    return %c0_i32, %c0_i32_0 : i32, i32
  }
  func.func @transform_9(%arg0: i32) -> (i32, i32) {
    %c0_i32 = arith.constant 0 : i32
    %c0_i32_0 = arith.constant 0 : i32
    return %arg0, %c0_i32 : i32, i32
  }
}

</mosaic_0001>

<llo_original>
// kernel: dqn_forward.1
$region0: #{dqn_forward.1}
  #allocation0 [shape = 'u32[]', space=smem, size = 0x4, offset = 0x4, fixed_abs, tag = 'smem constant byte address 0x4 - core index']
  #allocation1 [shape = 'u32[144,128]{1,0:T(1,128)}', space=vmem, size = 0x12000, scoped, tag = 'internal scratch']
  #allocation2 [shape = 'f32[1,1]{1,0:T(1,128)S(1)}', space=vmem, size = 0x200, scoped, tag = 'scoped memory for dqn_forward.1']
  %s0 = inlined_call_operand.vmem [shape: f32[256,128], index: 0, kind: input, shape index: {}]
  %s1 = inlined_call_operand.vmem [shape: bf16[128,256], index: 1, kind: input, shape index: {}]
  %s2 = inlined_call_operand.vmem [shape: f32[1,256], index: 2, kind: input, shape index: {}]
  %s3 = inlined_call_operand.vmem [shape: bf16[256,512], index: 3, kind: input, shape index: {}]
  %s4 = inlined_call_operand.vmem [shape: f32[1,512], index: 4, kind: input, shape index: {}]
  %s5 = inlined_call_operand.vmem [shape: f32[1,256], index: 5, kind: input, shape index: {}]
  %s6 = inlined_call_operand.<no memory space> [shape: f32[1,1], index: 6, kind: input, shape index: {}]
  %s7 = inlined_call_operand.vmem [shape: bf16[256,128], index: 7, kind: input, shape index: {}]
  %s8 = inlined_call_operand.vmem [shape: f32[1,128], index: 8, kind: input, shape index: {}]
  %s9 = inlined_call_operand.vmem [shape: f32[256,128], index: 9, kind: output, shape index: {}]
  %s10 = sld [smem:[#allocation0]]
  $region69: #{dqn_forward.1} parent=0
    _
  %s12 = ssub.s32 1, %s10
  %s13 = scalar_select 0, %s12, %s10
  %v14 = vstv %s6
  %15 = vst [vmem:[#allocation2] sm:$0x1] %v14
  loop: start=0, step=1, limit=4
  $region2: #{dqn_forward.1} parent=0 // loop_pre_header
    _
  $region3: #{dqn_forward.1} parent=0 // loop_header
    %s17 = sphi 0, %s21
    %p18 = scmp.ge.s32.totalorder %s17, 4
    %s27 = sphi 0, %s29
    %s30 = sphi 0, %s27
    %s31 = sphi 0, %s30
    %s47 = sphi 0, %s31
    %s51 = sphi 0, %s51
    %s53 = sphi 0, %s51
    %s54 = sphi 0, %s53
    %s68 = sphi 0, %s54
    %s72 = sphi 0, %s72
    %s74 = sphi 0, %s72
    %s75 = sphi 0, %s74
    %s89 = sphi 0, %s75
    %s93 = sphi 0, %s93
    %s95 = sphi 0, %s93
    %s96 = sphi 0, %s95
    %s110 = sphi 0, %s96
    %s114 = sphi 0, %s114
    %s116 = sphi 0, %s114
    %s117 = sphi 0, %s116
    %s131 = sphi 0, %s117
    %s135 = sphi 0, %s135
    %s137 = sphi 0, %s135
    %s138 = sphi 0, %s137
    %s152 = sphi 0, %s138
    %s156 = sphi 0, %s156
    %s158 = sphi 0, %s156
    %s159 = sphi 0, %s158
    %s173 = sphi 0, %s159
    %s177 = sphi 0, %s177
    %s179 = sphi 0, %s177
    %s180 = sphi 0, %s179
    %s194 = sphi 0, %s180
    %s198 = sphi 0, %s198
    %s200 = sphi 0, %s198
    %s201 = sphi 0, %s200
    %s215 = sphi 0, %s201
    %s221 = sphi 0, %s223
    %s224 = sphi 0, %s221
    %s225 = sphi 0, %s224
    %s241 = sphi 0, %s225
  $region4: #{dqn_forward.1} parent=0 // loop_header_branch
    %20 = sbr.rel (%p18) target = $region8
  $region5: #{dqn_forward.1} parent=0 // loop_body
    %s22 = ssub.s32 %s17, 1
    %s23 = ssub.s32 %s17, 2
    %s24 = sadd.s32 %s17, 1
    %s25 = ssub.s32 %s17, %s24
    %p26 = scmp.eq.s32.totalorder %s25, 0
    %s28 = sadd.s32 %s27, 1
    %s29 = scalar_select %p26, %s27, %s28
    %p32 = pneg %p26
    %p33 = scmp.eq.s32.totalorder %s17, 1
    %p34 = por %p32, %p33
    %p35 = scmp.ne.s32.totalorder %s27, %s30
    %p36 = scmp.eq.s32.totalorder %s17, 0
    %p37 = por %p35, %p36
    %p38 = scmp.ne.s32.totalorder %s27, %s30
    %p39 = scmp.eq.s32.totalorder %s22, 1
    %p40 = por %p38, %p39
    %p41 = scmp.ne.s32.totalorder %s30, %s31
    %p42 = scmp.eq.s32.totalorder %s22, 0
    %p43 = por %p41, %p42
    %p44 = scmp.ne.s32.totalorder %s30, %s31
    %p45 = scmp.eq.s32.totalorder %s23, 1
    %p46 = por %p44, %p45
    %p48 = scmp.ne.s32.totalorder %s31, %s47
    %p49 = scmp.eq.s32.totalorder %s23, 0
    %p50 = por %p48, %p49
    %s52 = sadd.s32 %s51, 1
    %p55 = scmp.eq.s32.totalorder %s17, 1
    %p56 = scmp.ne.s32.totalorder %s51, %s53
    %p57 = scmp.eq.s32.totalorder %s17, 0
    %p58 = por %p56, %p57
    %p59 = scmp.ne.s32.totalorder %s51, %s53
    %p60 = scmp.eq.s32.totalorder %s22, 1
    %p61 = por %p59, %p60
    %p62 = scmp.ne.s32.totalorder %s53, %s54
    %p63 = scmp.eq.s32.totalorder %s22, 0
    %p64 = por %p62, %p63
    %p65 = scmp.ne.s32.totalorder %s53, %s54
    %p66 = scmp.eq.s32.totalorder %s23, 1
    %p67 = por %p65, %p66
    %p69 = scmp.ne.s32.totalorder %s54, %s68
    %p70 = scmp.eq.s32.totalorder %s23, 0
    %p71 = por %p69, %p70
    %s73 = sadd.s32 %s72, 1
    %p76 = scmp.eq.s32.totalorder %s17, 1
    %p77 = scmp.ne.s32.totalorder %s72, %s74
    %p78 = scmp.eq.s32.totalorder %s17, 0
    %p79 = por %p77, %p78
    %p80 = scmp.ne.s32.totalorder %s72, %s74
    %p81 = scmp.eq.s32.totalorder %s22, 1
    %p82 = por %p80, %p81
    %p83 = scmp.ne.s32.totalorder %s74, %s75
    %p84 = scmp.eq.s32.totalorder %s22, 0
    %p85 = por %p83, %p84
    %p86 = scmp.ne.s32.totalorder %s74, %s75
    %p87 = scmp.eq.s32.totalorder %s23, 1
    %p88 = por %p86, %p87
    %p90 = scmp.ne.s32.totalorder %s75, %s89
    %p91 = scmp.eq.s32.totalorder %s23, 0
    %p92 = por %p90, %p91
    %s94 = sadd.s32 %s93, 1
    %p97 = scmp.eq.s32.totalorder %s17, 1
    %p98 = scmp.ne.s32.totalorder %s93, %s95
    %p99 = scmp.eq.s32.totalorder %s17, 0
    %p100 = por %p98, %p99
    %p101 = scmp.ne.s32.totalorder %s93, %s95
    %p102 = scmp.eq.s32.totalorder %s22, 1
    %p103 = por %p101, %p102
    %p104 = scmp.ne.s32.totalorder %s95, %s96
    %p105 = scmp.eq.s32.totalorder %s22, 0
    %p106 = por %p104, %p105
    %p107 = scmp.ne.s32.totalorder %s95, %s96
    %p108 = scmp.eq.s32.totalorder %s23, 1
    %p109 = por %p107, %p108
    %p111 = scmp.ne.s32.totalorder %s96, %s110
    %p112 = scmp.eq.s32.totalorder %s23, 0
    %p113 = por %p111, %p112
    %s115 = sadd.s32 %s114, 1
    %p118 = scmp.eq.s32.totalorder %s17, 1
    %p119 = scmp.ne.s32.totalorder %s114, %s116
    %p120 = scmp.eq.s32.totalorder %s17, 0
    %p121 = por %p119, %p120
    %p122 = scmp.ne.s32.totalorder %s114, %s116
    %p123 = scmp.eq.s32.totalorder %s22, 1
    %p124 = por %p122, %p123
    %p125 = scmp.ne.s32.totalorder %s116, %s117
    %p126 = scmp.eq.s32.totalorder %s22, 0
    %p127 = por %p125, %p126
    %p128 = scmp.ne.s32.totalorder %s116, %s117
    %p129 = scmp.eq.s32.totalorder %s23, 1
    %p130 = por %p128, %p129
    %p132 = scmp.ne.s32.totalorder %s117, %s131
    %p133 = scmp.eq.s32.totalorder %s23, 0
    %p134 = por %p132, %p133
    %s136 = sadd.s32 %s135, 1
    %p139 = scmp.eq.s32.totalorder %s17, 1
    %p140 = scmp.ne.s32.totalorder %s135, %s137
    %p141 = scmp.eq.s32.totalorder %s17, 0
    %p142 = por %p140, %p141
    %p143 = scmp.ne.s32.totalorder %s135, %s137
    %p144 = scmp.eq.s32.totalorder %s22, 1
    %p145 = por %p143, %p144
    %p146 = scmp.ne.s32.totalorder %s137, %s138
    %p147 = scmp.eq.s32.totalorder %s22, 0
    %p148 = por %p146, %p147
    %p149 = scmp.ne.s32.totalorder %s137, %s138
    %p150 = scmp.eq.s32.totalorder %s23, 1
    %p151 = por %p149, %p150
    %p153 = scmp.ne.s32.totalorder %s138, %s152
    %p154 = scmp.eq.s32.totalorder %s23, 0
    %p155 = por %p153, %p154
    %s157 = sadd.s32 %s156, 1
    %p160 = scmp.eq.s32.totalorder %s17, 1
    %p161 = scmp.ne.s32.totalorder %s156, %s158
    %p162 = scmp.eq.s32.totalorder %s17, 0
    %p163 = por %p161, %p162
    %p164 = scmp.ne.s32.totalorder %s156, %s158
    %p165 = scmp.eq.s32.totalorder %s22, 1
    %p166 = por %p164, %p165
    %p167 = scmp.ne.s32.totalorder %s158, %s159
    %p168 = scmp.eq.s32.totalorder %s22, 0
    %p169 = por %p167, %p168
    %p170 = scmp.ne.s32.totalorder %s158, %s159
    %p171 = scmp.eq.s32.totalorder %s23, 1
    %p172 = por %p170, %p171
    %p174 = scmp.ne.s32.totalorder %s159, %s173
    %p175 = scmp.eq.s32.totalorder %s23, 0
    %p176 = por %p174, %p175
    %s178 = sadd.s32 %s177, 1
    %p181 = scmp.eq.s32.totalorder %s17, 1
    %p182 = scmp.ne.s32.totalorder %s177, %s179
    %p183 = scmp.eq.s32.totalorder %s17, 0
    %p184 = por %p182, %p183
    %p185 = scmp.ne.s32.totalorder %s177, %s179
    %p186 = scmp.eq.s32.totalorder %s22, 1
    %p187 = por %p185, %p186
    %p188 = scmp.ne.s32.totalorder %s179, %s180
    %p189 = scmp.eq.s32.totalorder %s22, 0
    %p190 = por %p188, %p189
    %p191 = scmp.ne.s32.totalorder %s179, %s180
    %p192 = scmp.eq.s32.totalorder %s23, 1
    %p193 = por %p191, %p192
    %p195 = scmp.ne.s32.totalorder %s180, %s194
    %p196 = scmp.eq.s32.totalorder %s23, 0
    %p197 = por %p195, %p196
    %s199 = sadd.s32 %s198, 1
    %p202 = scmp.eq.s32.totalorder %s17, 1
    %p203 = scmp.ne.s32.totalorder %s198, %s200
    %p204 = scmp.eq.s32.totalorder %s17, 0
    %p205 = por %p203, %p204
    %p206 = scmp.ne.s32.totalorder %s198, %s200
    %p207 = scmp.eq.s32.totalorder %s22, 1
    %p208 = por %p206, %p207
    %p209 = scmp.ne.s32.totalorder %s200, %s201
    %p210 = scmp.eq.s32.totalorder %s22, 0
    %p211 = por %p209, %p210
    %p212 = scmp.ne.s32.totalorder %s200, %s201
    %p213 = scmp.eq.s32.totalorder %s23, 1
    %p214 = por %p212, %p213
    %p216 = scmp.ne.s32.totalorder %s201, %s215
    %p217 = scmp.eq.s32.totalorder %s23, 0
    %p218 = por %p216, %p217
    %s219 = ssub.s32 %s17, %s24
    %p220 = scmp.eq.s32.totalorder %s219, 0
    %s222 = sadd.s32 %s221, 1
    %s223 = scalar_select %p220, %s221, %s222
    %p226 = pneg %p220
    %p227 = scmp.eq.s32.totalorder %s17, 1
    %p228 = por %p226, %p227
    %p229 = scmp.ne.s32.totalorder %s221, %s224
    %p230 = scmp.eq.s32.totalorder %s17, 0
    %p231 = por %p229, %p230
    %p232 = scmp.ne.s32.totalorder %s221, %s224
    %p233 = scmp.eq.s32.totalorder %s22, 1
    %p234 = por %p232, %p233
    %p235 = scmp.ne.s32.totalorder %s224, %s225
    %p236 = scmp.eq.s32.totalorder %s22, 0
    %p237 = por %p235, %p236
    %p238 = scmp.ne.s32.totalorder %s224, %s225
    %p239 = scmp.eq.s32.totalorder %s23, 1
    %p240 = por %p238, %p239
    %p242 = scmp.ne.s32.totalorder %s225, %s241
    %p243 = scmp.eq.s32.totalorder %s23, 0
    %p244 = por %p242, %p243
    %p245 = scmp.le.s32.totalorder 1, %s17
    %p246 = scmp.lt.s32.totalorder %s17, 3
    %p247 = pnand %p245, %p246
    %p248 = pneg %p247
    // Predicated region
    $region9: #{dqn_forward.1} parent=5 // pred_check
      _
    $region10: #{dqn_forward.1} parent=5 // pred_check_branch
      %250 = sbr.rel (%p247) target = $region12
    $region11: #{dqn_forward.1} parent=5 // pred_region
      %s251 = ssub.s32 %s17, 1
      // Predicated region
      $region13: #{dqn_forward.1} parent=11 // pred_check
        %p252 = pneg %p64
      $region14: #{dqn_forward.1} parent=11 // pred_check_branch
        %254 = sbr.rel (%p252) target = $region16
      $region15: #{dqn_forward.1} parent=11 // pred_region
        _
      $region16: #{dqn_forward.1} parent=11 // pred_fallthru
        _
      // Predicated region
      $region17: #{dqn_forward.1} parent=11 // pred_check
        %p255 = pneg %p85
      $region18: #{dqn_forward.1} parent=11 // pred_check_branch
        %257 = sbr.rel (%p255) target = $region20
      $region19: #{dqn_forward.1} parent=11 // pred_region
        _
      $region20: #{dqn_forward.1} parent=11 // pred_fallthru
        _
      // Predicated region
      $region21: #{dqn_forward.1} parent=11 // pred_check
        %p258 = pneg %p106
      $region22: #{dqn_forward.1} parent=11 // pred_check_branch
        %260 = sbr.rel (%p258) target = $region24
      $region23: #{dqn_forward.1} parent=11 // pred_region
        _
      $region24: #{dqn_forward.1} parent=11 // pred_fallthru
        _
      // Predicated region
      $region25: #{dqn_forward.1} parent=11 // pred_check
        %p261 = pneg %p127
      $region26: #{dqn_forward.1} parent=11 // pred_check_branch
        %263 = sbr.rel (%p261) target = $region28
      $region27: #{dqn_forward.1} parent=11 // pred_region
        _
      $region28: #{dqn_forward.1} parent=11 // pred_fallthru
        _
      // Predicated region
      $region29: #{dqn_forward.1} parent=11 // pred_check
        %p264 = pneg %p148
      $region30: #{dqn_forward.1} parent=11 // pred_check_branch
        %266 = sbr.rel (%p264) target = $region32
      $region31: #{dqn_forward.1} parent=11 // pred_region
        _
      $region32: #{dqn_forward.1} parent=11 // pred_fallthru
        _
      // Predicated region
      $region33: #{dqn_forward.1} parent=11 // pred_check
        %p267 = pneg %p169
      $region34: #{dqn_forward.1} parent=11 // pred_check_branch
        %269 = sbr.rel (%p267) target = $region36
      $region35: #{dqn_forward.1} parent=11 // pred_region
        _
      $region36: #{dqn_forward.1} parent=11 // pred_fallthru
        _
      // Predicated region
      $region37: #{dqn_forward.1} parent=11 // pred_check
        %p270 = pneg %p190
      $region38: #{dqn_forward.1} parent=11 // pred_check_branch
        %272 = sbr.rel (%p270) target = $region40
      $region39: #{dqn_forward.1} parent=11 // pred_region
        _
      $region40: #{dqn_forward.1} parent=11 // pred_fallthru
        _
      // Predicated region
      $region41: #{dqn_forward.1} parent=11 // pred_check
        %p273 = pneg %p211
      $region42: #{dqn_forward.1} parent=11 // pred_check_branch
        %275 = sbr.rel (%p273) target = $region44
      $region43: #{dqn_forward.1} parent=11 // pred_region
        _
      $region44: #{dqn_forward.1} parent=11 // pred_fallthru
        _
    $region12: #{dqn_forward.1} parent=5 // pred_fallthru
      _
    %p276 = scmp.lt.s32.totalorder %s17, 2
    // Predicated region
    $region45: #{dqn_forward.1} parent=5 // pred_check
      %p277 = pneg %p276
    $region46: #{dqn_forward.1} parent=5 // pred_check_branch
      %279 = sbr.rel (%p277) target = $region48
    $region47: #{dqn_forward.1} parent=5 // pred_region
      // Predicated region
      $region49: #{dqn_forward.1} parent=47 // pred_check
        %p280 = pneg %p37
      $region50: #{dqn_forward.1} parent=47 // pred_check_branch
        %282 = sbr.rel (%p280) target = $region52
      $region51: #{dqn_forward.1} parent=47 // pred_region
        %s283 = smul.u32 16, %s17
        %p284 = scmp.lt.s32.totalorder %s283, 31
        %s285 = scalar_select %p284, %s283, 31
        %s286 = smul.addr %s285, 8
        %s287 = scalar_lea.vmem %s0, %s286
        %s288 = smul.u32 16, %s17
      $region52: #{dqn_forward.1} parent=47 // pred_fallthru
        _
    $region48: #{dqn_forward.1} parent=5 // pred_fallthru
      _
    %p289 = scmp.le.s32.totalorder 1, %s17
    %p290 = scmp.lt.s32.totalorder %s17, 3
    %p291 = pnand %p289, %p290
    %p292 = pneg %p291
    // Predicated region
    $region53: #{dqn_forward.1} parent=5 // pred_check
      _
    $region54: #{dqn_forward.1} parent=5 // pred_check_branch
      %294 = sbr.rel (%p291) target = $region56
    $region55: #{dqn_forward.1} parent=5 // pred_region
      %s295 = ssub.s32 %s17, 1
      %s296 = smul.u32 16, %s22
      %p297 = scmp.lt.s32.totalorder %s296, 31
      %s298 = scalar_select %p297, %s296, 31
      %s299 = smul.addr %s298, 8
      %s300 = scalar_lea.vmem %s0, %s299
      %p301 = pneg %p43
      %p302 = pneg %p40
      %p303 = pneg %p64
      %p304 = pneg %p61
      %p305 = pneg %p85
      %p306 = pneg %p82
      %p307 = pneg %p106
      %p308 = pneg %p103
      %p309 = pneg %p127
      %p310 = pneg %p124
      %p311 = pneg %p148
      %p312 = pneg %p145
      %p313 = pneg %p169
      %p314 = pneg %p166
      %p315 = pneg %p190
      %p316 = pneg %p187
      %p317 = pneg %p211
      %p318 = pneg %p208
      %p319 = pneg %p237
      %p320 = pneg %p234
      %s321 = smul.u32 16, %s22
      %p322 = scmp.lt.s32.totalorder %s321, 31
      %s323 = scalar_select %p322, %s321, 31
      %s324 = smul.addr %s323, 8
      %s325 = scalar_lea.vmem %s9, %s324
      %s326 = smul.u32 16, %s22
      %p327 = scmp.lt.s32.totalorder %s326, 31
      %s328 = scalar_select %p327, %s326, 31
      %s329 = smul.addr %s328, 8
      %s330 = scalar_lea.vmem %s0, %s329
      %s331 = smul.u32 16, %s22
      %s332 = smul.u32 16, %s22
      %p333 = scmp.lt.s32.totalorder %s332, 31
      %s334 = scalar_select %p333, %s332, 31
      %s335 = smul.addr %s334, 8
      %s336 = scalar_lea.vmem %s9, %s335
      %s337 = smul.u32 16, %s22
      %v339 = vld [vmem:[%s330] sm:$0xff]
      %v340 = vld [vmem:[%s330 + $0x8] sm:$0xff]
      %v341 = vld [vmem:[%s330 + $0x10] sm:$0xff]
      %v342 = vld [vmem:[%s330 + $0x18] sm:$0xff]
      %v343 = vld [vmem:[%s330 + $0x20] sm:$0xff]
      %v344 = vld [vmem:[%s330 + $0x28] sm:$0xff]
      %v345 = vld [vmem:[%s330 + $0x30] sm:$0xff]
      %v346 = vld [vmem:[%s330 + $0x38] sm:$0xff]
      %v347 = vld [vmem:[%s330 + $0x40] sm:$0xff]
      %v348 = vld [vmem:[%s330 + $0x48] sm:$0xff]
      %v349 = vld [vmem:[%s330 + $0x50] sm:$0xff]
      %v350 = vld [vmem:[%s330 + $0x58] sm:$0xff]
      %v351 = vld [vmem:[%s330 + $0x60] sm:$0xff]
      %v352 = vld [vmem:[%s330 + $0x68] sm:$0xff]
      %v353 = vld [vmem:[%s330 + $0x70] sm:$0xff]
      %v354 = vld [vmem:[%s330 + $0x78] sm:$0xff]
      %v355 = vpack.c.bf16 %v340, %v339
      %v356 = vpack.c.bf16 %v342, %v341
      %v357 = vpack.c.bf16 %v344, %v343
      %v358 = vpack.c.bf16 %v346, %v345
      %v359 = vpack.c.bf16 %v348, %v347
      %v360 = vpack.c.bf16 %v350, %v349
      %v361 = vpack.c.bf16 %v352, %v351
      %v362 = vpack.c.bf16 %v354, %v353
      %v363 = vld [vmem:[%s1] sm:$0xff]
      %v364 = vld [vmem:[%s1 + $0x8] sm:$0xff]
      %v365 = vld [vmem:[%s1 + $0x10] sm:$0xff]
      %v366 = vld [vmem:[%s1 + $0x18] sm:$0xff]
      %v367 = vld [vmem:[%s1 + $0x20] sm:$0xff]
      %v368 = vld [vmem:[%s1 + $0x28] sm:$0xff]
      %v369 = vld [vmem:[%s1 + $0x30] sm:$0xff]
      %v370 = vld [vmem:[%s1 + $0x38] sm:$0xff]
      %v371 = vld [vmem:[%s1 + $0x40] sm:$0xff]
      %v372 = vld [vmem:[%s1 + $0x48] sm:$0xff]
      %v373 = vld [vmem:[%s1 + $0x50] sm:$0xff]
      %v374 = vld [vmem:[%s1 + $0x58] sm:$0xff]
      %v375 = vld [vmem:[%s1 + $0x60] sm:$0xff]
      %v376 = vld [vmem:[%s1 + $0x68] sm:$0xff]
      %v377 = vld [vmem:[%s1 + $0x70] sm:$0xff]
      %v378 = vld [vmem:[%s1 + $0x78] sm:$0xff]
      %v379 = vld [vmem:[%s2] sm:$0x3]
      %v381 = vlaneseq
      %v382 = vshrl.u32 %v381, 7
      %v383 = vsub.s32 0, %v382
      %v384 = vrot.slane %v379, %v383
      %v385 = vlaneseq
      %v386 = vshrl.u32 %v385, 7
      %v387 = vsub.s32 1, %v386
      %v388 = vrot.slane %v379, %v387
      %v407 = vunpack.c.l.b16 %v363
      %v408 = vunpack.c.h.b16 %v363
      %v409 = vunpack.c.l.b16 %v364
      %v410 = vunpack.c.h.b16 %v364
      %v411 = vunpack.c.l.b16 %v365
      %v412 = vunpack.c.h.b16 %v365
      %v413 = vunpack.c.l.b16 %v366
      %v414 = vunpack.c.h.b16 %v366
      %v415 = vunpack.c.l.b16 %v367
      %v416 = vunpack.c.h.b16 %v367
      %v417 = vunpack.c.l.b16 %v368
      %v418 = vunpack.c.h.b16 %v368
      %v419 = vunpack.c.l.b16 %v369
      %v420 = vunpack.c.h.b16 %v369
      %v421 = vunpack.c.l.b16 %v370
      %v422 = vunpack.c.h.b16 %v370
      %v423 = vunpack.c.l.b16 %v371
      %v424 = vunpack.c.h.b16 %v371
      %v425 = vunpack.c.l.b16 %v372
      %v426 = vunpack.c.h.b16 %v372
      %v427 = vunpack.c.l.b16 %v373
      %v428 = vunpack.c.h.b16 %v373
      %v429 = vunpack.c.l.b16 %v374
      %v430 = vunpack.c.h.b16 %v374
      %v431 = vunpack.c.l.b16 %v375
      %v432 = vunpack.c.h.b16 %v375
      %v433 = vunpack.c.l.b16 %v376
      %v434 = vunpack.c.h.b16 %v376
      %v435 = vunpack.c.l.b16 %v377
      %v436 = vunpack.c.h.b16 %v377
      %v437 = vunpack.c.l.b16 %v378
      %v438 = vunpack.c.h.b16 %v378
      %v439 = vpack.c.b16 %v409, %v407
      %v440 = vpack.c.b16 %v410, %v408
      %v441 = vpack.c.b16 %v413, %v411
      %v442 = vpack.c.b16 %v414, %v412
      %v443 = vpack.c.b16 %v417, %v415
      %v444 = vpack.c.b16 %v418, %v416
      %v445 = vpack.c.b16 %v421, %v419
      %v446 = vpack.c.b16 %v422, %v420
      %v447 = vpack.c.b16 %v425, %v423
      %v448 = vpack.c.b16 %v426, %v424
      %v449 = vpack.c.b16 %v429, %v427
      %v450 = vpack.c.b16 %v430, %v428
      %v451 = vpack.c.b16 %v433, %v431
      %v452 = vpack.c.b16 %v434, %v432
      %v453 = vpack.c.b16 %v437, %v435
      %v454 = vpack.c.b16 %v438, %v436
      %471 = vmatprep.subr.bf16.mxu0 %v440
      %472 = vmatpush1.bf16.msra.mxu0 %v439
      %473 = vmatprep.subr.bf16.mxu0 %v442
      %474 = vmatpush1.bf16.msra.mxu0 %v441
      %475 = vmatprep.subr.bf16.mxu0 %v444
      %476 = vmatpush1.bf16.msra.mxu0 %v443
      %477 = vmatprep.subr.bf16.mxu0 %v446
      %478 = vmatpush1.bf16.msra.mxu0 %v445
      %479 = vmatprep.subr.bf16.mxu0 %v448
      %480 = vmatpush1.bf16.msra.mxu0 %v447
      %481 = vmatprep.subr.bf16.mxu0 %v450
      %482 = vmatpush1.bf16.msra.mxu0 %v449
      %483 = vmatprep.subr.bf16.mxu0 %v452
      %484 = vmatpush1.bf16.msra.mxu0 %v451
      %485 = vmatprep.subr.bf16.mxu0 %v454
      %486 = vmatpush1.bf16.msra.mxu0 %v453
      %487 = vmatprep.subr.bf16.mxu0 0
      %488 = vmatpush1.bf16.msra.mxu0 0
      %489 = vmatprep.subr.bf16.mxu0 0
      %490 = vmatpush1.bf16.msra.mxu0 0
      %491 = vmatprep.subr.bf16.mxu0 0
      %492 = vmatpush1.bf16.msra.mxu0 0
      %493 = vmatprep.subr.bf16.mxu0 0
      %494 = vmatpush1.bf16.msra.mxu0 0
      %495 = vmatprep.subr.bf16.mxu0 0
      %496 = vmatpush1.bf16.msra.mxu0 0
      %497 = vmatprep.subr.bf16.mxu0 0
      %498 = vmatpush1.bf16.msra.mxu0 0
      %499 = vmatprep.subr.bf16.mxu0 0
      %500 = vmatpush1.bf16.msra.mxu0 0
      %501 = vmatprep.subr.bf16.mxu0 0
      %502 = vmatpush1.bf16.msra.mxu0 0
      %503 = vmatprep.mubr.bf16.mxu0 0
      %504 = vmatmul.mubr.bf16.gmra.mrb[0].mxu0 %v355
      %v505 = vpop.f32.mrb[0].mxu0
      %v506 = vadd.f32 %v384, %v505
      %v507 = vpop.f32.mrb[0].mxu0
      %v508 = vadd.f32 %v388, %v507
      %v509 = vpop.f32.mrb[0].mxu0
      %v510 = vadd.f32 %v384, %v509
      %v511 = vpop.f32.mrb[0].mxu0
      %v512 = vadd.f32 %v388, %v511
      %513 = vmatprep.mubr.bf16.mxu0 0
      %514 = vmatmul.mubr.bf16.gmra.mrb[0].mxu0 %v356
      %v515 = vpop.f32.mrb[0].mxu0
      %v516 = vadd.f32 %v384, %v515
      %v517 = vpop.f32.mrb[0].mxu0
      %v518 = vadd.f32 %v388, %v517
      %v519 = vpop.f32.mrb[0].mxu0
      %v520 = vadd.f32 %v384, %v519
      %v521 = vpop.f32.mrb[0].mxu0
      %v522 = vadd.f32 %v388, %v521
      %523 = vmatprep.mubr.bf16.mxu0 0
      %524 = vmatmul.mubr.bf16.gmra.mrb[0].mxu0 %v357
      %v525 = vpop.f32.mrb[0].mxu0
      %v526 = vadd.f32 %v384, %v525
      %v527 = vpop.f32.mrb[0].mxu0
      %v528 = vadd.f32 %v388, %v527
      %v529 = vpop.f32.mrb[0].mxu0
      %v530 = vadd.f32 %v384, %v529
      %v531 = vpop.f32.mrb[0].mxu0
      %v532 = vadd.f32 %v388, %v531
      %533 = vmatprep.mubr.bf16.mxu0 0
      %534 = vmatmul.mubr.bf16.gmra.mrb[0].mxu0 %v358
      %v535 = vpop.f32.mrb[0].mxu0
      %v536 = vadd.f32 %v384, %v535
      %v537 = vpop.f32.mrb[0].mxu0
      %v538 = vadd.f32 %v388, %v537
      %v539 = vpop.f32.mrb[0].mxu0
      %v540 = vadd.f32 %v384, %v539
      %v541 = vpop.f32.mrb[0].mxu0
      %v542 = vadd.f32 %v388, %v541
      %543 = vmatprep.mubr.bf16.mxu0 0
      %544 = vmatmul.mubr.bf16.gmra.mrb[0].mxu0 %v359
      %v545 = vpop.f32.mrb[0].mxu0
      %v546 = vadd.f32 %v384, %v545
      %v547 = vpop.f32.mrb[0].mxu0
      %v548 = vadd.f32 %v388, %v547
      %v549 = vpop.f32.mrb[0].mxu0
      %v550 = vadd.f32 %v384, %v549
      %v551 = vpop.f32.mrb[0].mxu0
      %v552 = vadd.f32 %v388, %v551
      %553 = vmatprep.mubr.bf16.mxu0 0
      %554 = vmatmul.mubr.bf16.gmra.mrb[0].mxu0 %v360
      %v555 = vpop.f32.mrb[0].mxu0
      %v556 = vadd.f32 %v384, %v555
      %v557 = vpop.f32.mrb[0].mxu0
      %v558 = vadd.f32 %v388, %v557
      %v559 = vpop.f32.mrb[0].mxu0
      %v560 = vadd.f32 %v384, %v559
      %v561 = vpop.f32.mrb[0].mxu0
      %v562 = vadd.f32 %v388, %v561
      %563 = vmatprep.mubr.bf16.mxu0 0
      %564 = vmatmul.mubr.bf16.gmra.mrb[0].mxu0 %v361
      %v565 = vpop.f32.mrb[0].mxu0
      %v566 = vadd.f32 %v384, %v565
      %v567 = vpop.f32.mrb[0].mxu0
      %v568 = vadd.f32 %v388, %v567
      %v569 = vpop.f32.mrb[0].mxu0
      %v570 = vadd.f32 %v384, %v569
      %v571 = vpop.f32.mrb[0].mxu0
      %v572 = vadd.f32 %v388, %v571
      %573 = vmatprep.mubr.bf16.mxu0 0
      %574 = vmatmul.mubr.bf16.gmra.mrb[0].mxu0 %v362
      %v575 = vpop.f32.mrb[0].mxu0
      %v576 = vadd.f32 %v384, %v575
      %v577 = vpop.f32.mrb[0].mxu0
      %v578 = vadd.f32 %v388, %v577
      %v579 = vpop.f32.mrb[0].mxu0
      %v580 = vadd.f32 %v384, %v579
      %v581 = vpop.f32.mrb[0].mxu0
      %v582 = vadd.f32 %v388, %v581
      %583 = vdwg.mxu0
      %v584 = vmax.f32 %v506, 0.0
      %v585 = vmax.f32 %v508, 0.0
      %v586 = vmax.f32 %v510, 0.0
      %v587 = vmax.f32 %v512, 0.0
      %v588 = vmax.f32 %v516, 0.0
      %v589 = vmax.f32 %v518, 0.0
      %v590 = vmax.f32 %v520, 0.0
      %v591 = vmax.f32 %v522, 0.0
      %v592 = vmax.f32 %v526, 0.0
      %v593 = vmax.f32 %v528, 0.0
      %v594 = vmax.f32 %v530, 0.0
      %v595 = vmax.f32 %v532, 0.0
      %v596 = vmax.f32 %v536, 0.0
      %v597 = vmax.f32 %v538, 0.0
      %v598 = vmax.f32 %v540, 0.0
      %v599 = vmax.f32 %v542, 0.0
      %v600 = vmax.f32 %v546, 0.0
      %v601 = vmax.f32 %v548, 0.0
      %v602 = vmax.f32 %v550, 0.0
      %v603 = vmax.f32 %v552, 0.0
      %v604 = vmax.f32 %v556, 0.0
      %v605 = vmax.f32 %v558, 0.0
      %v606 = vmax.f32 %v560, 0.0
      %v607 = vmax.f32 %v562, 0.0
      %v608 = vmax.f32 %v566, 0.0
      %v609 = vmax.f32 %v568, 0.0
      %v610 = vmax.f32 %v570, 0.0
      %v611 = vmax.f32 %v572, 0.0
      %v612 = vmax.f32 %v576, 0.0
      %v613 = vmax.f32 %v578, 0.0
      %v614 = vmax.f32 %v580, 0.0
      %v615 = vmax.f32 %v582, 0.0
      %v616 = vpack.c.bf16 %v586, %v584
      %v617 = vpack.c.bf16 %v587, %v585
      %v618 = vpack.c.bf16 %v590, %v588
      %v619 = vpack.c.bf16 %v591, %v589
      %v620 = vpack.c.bf16 %v594, %v592
      %v621 = vpack.c.bf16 %v595, %v593
      %v622 = vpack.c.bf16 %v598, %v596
      %v623 = vpack.c.bf16 %v599, %v597
      %v624 = vpack.c.bf16 %v602, %v600
      %v625 = vpack.c.bf16 %v603, %v601
      %v626 = vpack.c.bf16 %v606, %v604
      %v627 = vpack.c.bf16 %v607, %v605
      %v628 = vpack.c.bf16 %v610, %v608
      %v629 = vpack.c.bf16 %v611, %v609
      %v630 = vpack.c.bf16 %v614, %v612
      %v631 = vpack.c.bf16 %v615, %v613
      %v632 = vld [vmem:[%s3] sm:$0xff]
      %v633 = vld [vmem:[%s3 + $0x8] sm:$0xff]
      %v634 = vld [vmem:[%s3 + $0x10] sm:$0xff]
      %v635 = vld [vmem:[%s3 + $0x18] sm:$0xff]
      %v636 = vld [vmem:[%s3 + $0x20] sm:$0xff]
      %v637 = vld [vmem:[%s3 + $0x28] sm:$0xff]
      %v638 = vld [vmem:[%s3 + $0x30] sm:$0xff]
      %v639 = vld [vmem:[%s3 + $0x38] sm:$0xff]
      %v640 = vld [vmem:[%s3 + $0x40] sm:$0xff]
      %v641 = vld [vmem:[%s3 + $0x48] sm:$0xff]
      %v642 = vld [vmem:[%s3 + $0x50] sm:$0xff]
      %v643 = vld [vmem:[%s3 + $0x58] sm:$0xff]
      %v644 = vld [vmem:[%s3 + $0x60] sm:$0xff]
      %v645 = vld [vmem:[%s3 + $0x68] sm:$0xff]
      %v646 = vld [vmem:[%s3 + $0x70] sm:$0xff]
      %v647 = vld [vmem:[%s3 + $0x78] sm:$0xff]
      %v648 = vld [vmem:[%s3 + $0x80] sm:$0xff]
      %v649 = vld [vmem:[%s3 + $0x88] sm:$0xff]
      %v650 = vld [vmem:[%s3 + $0x90] sm:$0xff]
      %v651 = vld [vmem:[%s3 + $0x98] sm:$0xff]
      %v652 = vld [vmem:[%s3 + $0xa0] sm:$0xff]
      %v653 = vld [vmem:[%s3 + $0xa8] sm:$0xff]
      %v654 = vld [vmem:[%s3 + $0xb0] sm:$0xff]
      %v655 = vld [vmem:[%s3 + $0xb8] sm:$0xff]
      %v656 = vld [vmem:[%s3 + $0xc0] sm:$0xff]
      %v657 = vld [vmem:[%s3 + $0xc8] sm:$0xff]
      %v658 = vld [vmem:[%s3 + $0xd0] sm:$0xff]
      %v659 = vld [vmem:[%s3 + $0xd8] sm:$0xff]
      %v660 = vld [vmem:[%s3 + $0xe0] sm:$0xff]
      %v661 = vld [vmem:[%s3 + $0xe8] sm:$0xff]
      %v662 = vld [vmem:[%s3 + $0xf0] sm:$0xff]
      %v663 = vld [vmem:[%s3 + $0xf8] sm:$0xff]
      %v664 = vld [vmem:[%s3 + $0x100] sm:$0xff]
      %v665 = vld [vmem:[%s3 + $0x108] sm:$0xff]
      %v666 = vld [vmem:[%s3 + $0x110] sm:$0xff]
      %v667 = vld [vmem:[%s3 + $0x118] sm:$0xff]
      %v668 = vld [vmem:[%s3 + $0x120] sm:$0xff]
      %v669 = vld [vmem:[%s3 + $0x128] sm:$0xff]
      %v670 = vld [vmem:[%s3 + $0x130] sm:$0xff]
      %v671 = vld [vmem:[%s3 + $0x138] sm:$0xff]
      %v672 = vld [vmem:[%s3 + $0x140] sm:$0xff]
      %v673 = vld [vmem:[%s3 + $0x148] sm:$0xff]
      %v674 = vld [vmem:[%s3 + $0x150] sm:$0xff]
      %v675 = vld [vmem:[%s3 + $0x158] sm:$0xff]
      %v676 = vld [vmem:[%s3 + $0x160] sm:$0xff]
      %v677 = vld [vmem:[%s3 + $0x168] sm:$0xff]
      %v678 = vld [vmem:[%s3 + $0x170] sm:$0xff]
      %v679 = vld [vmem:[%s3 + $0x178] sm:$0xff]
      %v680 = vld [vmem:[%s3 + $0x180] sm:$0xff]
      %v681 = vld [vmem:[%s3 + $0x188] sm:$0xff]
      %v682 = vld [vmem:[%s3 + $0x190] sm:$0xff]
      %v683 = vld [vmem:[%s3 + $0x198] sm:$0xff]
      %v684 = vld [vmem:[%s3 + $0x1a0] sm:$0xff]
      %v685 = vld [vmem:[%s3 + $0x1a8] sm:$0xff]
      %v686 = vld [vmem:[%s3 + $0x1b0] sm:$0xff]
      %v687 = vld [vmem:[%s3 + $0x1b8] sm:$0xff]
      %v688 = vld [vmem:[%s3 + $0x1c0] sm:$0xff]
      %v689 = vld [vmem:[%s3 + $0x1c8] sm:$0xff]
      %v690 = vld [vmem:[%s3 + $0x1d0] sm:$0xff]
      %v691 = vld [vmem:[%s3 + $0x1d8] sm:$0xff]
      %v692 = vld [vmem:[%s3 + $0x1e0] sm:$0xff]
      %v693 = vld [vmem:[%s3 + $0x1e8] sm:$0xff]
      %v694 = vld [vmem:[%s3 + $0x1f0] sm:$0xff]
      %v695 = vld [vmem:[%s3 + $0x1f8] sm:$0xff]
      %v696 = vld [vmem:[%s4] sm:$0xf]
      %v698 = vlaneseq
      %v699 = vshrl.u32 %v698, 7
      %v700 = vsub.s32 0, %v699
      %v701 = vrot.slane %v696, %v700
      %v702 = vlaneseq
      %v703 = vshrl.u32 %v702, 7
      %v704 = vsub.s32 1, %v703
      %v705 = vrot.slane %v696, %v704
      %v706 = vlaneseq
      %v707 = vshrl.u32 %v706, 7
      %v708 = vsub.s32 2, %v707
      %v709 = vrot.slane %v696, %v708
      %v710 = vlaneseq
      %v711 = vshrl.u32 %v710, 7
      %v712 = vsub.s32 3, %v711
      %v713 = vrot.slane %v696, %v712
      %v782 = vunpack.c.l.b16 %v632
      %v783 = vunpack.c.h.b16 %v632
      %v784 = vunpack.c.l.b16 %v633
      %v785 = vunpack.c.h.b16 %v633
      %v786 = vunpack.c.l.b16 %v634
      %v787 = vunpack.c.h.b16 %v634
      %v788 = vunpack.c.l.b16 %v635
      %v789 = vunpack.c.h.b16 %v635
      %v790 = vunpack.c.l.b16 %v636
      %v791 = vunpack.c.h.b16 %v636
      %v792 = vunpack.c.l.b16 %v637
      %v793 = vunpack.c.h.b16 %v637
      %v794 = vunpack.c.l.b16 %v638
      %v795 = vunpack.c.h.b16 %v638
      %v796 = vunpack.c.l.b16 %v639
      %v797 = vunpack.c.h.b16 %v639
      %v798 = vunpack.c.l.b16 %v640
      %v799 = vunpack.c.h.b16 %v640
      %v800 = vunpack.c.l.b16 %v641
      %v801 = vunpack.c.h.b16 %v641
      %v802 = vunpack.c.l.b16 %v642
      %v803 = vunpack.c.h.b16 %v642
      %v804 = vunpack.c.l.b16 %v643
      %v805 = vunpack.c.h.b16 %v643
      %v806 = vunpack.c.l.b16 %v644
      %v807 = vunpack.c.h.b16 %v644
      %v808 = vunpack.c.l.b16 %v645
      %v809 = vunpack.c.h.b16 %v645
      %v810 = vunpack.c.l.b16 %v646
      %v811 = vunpack.c.h.b16 %v646
      %v812 = vunpack.c.l.b16 %v647
      %v813 = vunpack.c.h.b16 %v647
      %v814 = vunpack.c.l.b16 %v648
      %v815 = vunpack.c.h.b16 %v648
      %v816 = vunpack.c.l.b16 %v649
      %v817 = vunpack.c.h.b16 %v649
      %v818 = vunpack.c.l.b16 %v650
      %v819 = vunpack.c.h.b16 %v650
      %v820 = vunpack.c.l.b16 %v651
      %v821 = vunpack.c.h.b16 %v651
      %v822 = vunpack.c.l.b16 %v652
      %v823 = vunpack.c.h.b16 %v652
      %v824 = vunpack.c.l.b16 %v653
      %v825 = vunpack.c.h.b16 %v653
      %v826 = vunpack.c.l.b16 %v654
      %v827 = vunpack.c.h.b16 %v654
      %v828 = vunpack.c.l.b16 %v655
      %v829 = vunpack.c.h.b16 %v655
      %v830 = vunpack.c.l.b16 %v656
      %v831 = vunpack.c.h.b16 %v656
      %v832 = vunpack.c.l.b16 %v657
      %v833 = vunpack.c.h.b16 %v657
      %v834 = vunpack.c.l.b16 %v658
      %v835 = vunpack.c.h.b16 %v658
      %v836 = vunpack.c.l.b16 %v659
      %v837 = vunpack.c.h.b16 %v659
      %v838 = vunpack.c.l.b16 %v660
      %v839 = vunpack.c.h.b16 %v660
      %v840 = vunpack.c.l.b16 %v661
      %v841 = vunpack.c.h.b16 %v661
      %v842 = vunpack.c.l.b16 %v662
      %v843 = vunpack.c.h.b16 %v662
      %v844 = vunpack.c.l.b16 %v663
      %v845 = vunpack.c.h.b16 %v663
      %v846 = vunpack.c.l.b16 %v664
      %v847 = vunpack.c.h.b16 %v664
      %v848 = vunpack.c.l.b16 %v665
      %v849 = vunpack.c.h.b16 %v665
      %v850 = vunpack.c.l.b16 %v666
      %v851 = vunpack.c.h.b16 %v666
      %v852 = vunpack.c.l.b16 %v667
      %v853 = vunpack.c.h.b16 %v667
      %v854 = vunpack.c.l.b16 %v668
      %v855 = vunpack.c.h.b16 %v668
      %v856 = vunpack.c.l.b16 %v669
      %v857 = vunpack.c.h.b16 %v669
      %v858 = vunpack.c.l.b16 %v670
      %v859 = vunpack.c.h.b16 %v670
      %v860 = vunpack.c.l.b16 %v671
      %v861 = vunpack.c.h.b16 %v671
      %v862 = vunpack.c.l.b16 %v672
      %v863 = vunpack.c.h.b16 %v672
      %v864 = vunpack.c.l.b16 %v673
      %v865 = vunpack.c.h.b16 %v673
      %v866 = vunpack.c.l.b16 %v674
      %v867 = vunpack.c.h.b16 %v674
      %v868 = vunpack.c.l.b16 %v675
      %v869 = vunpack.c.h.b16 %v675
      %v870 = vunpack.c.l.b16 %v676
      %v871 = vunpack.c.h.b16 %v676
      %v872 = vunpack.c.l.b16 %v677
      %v873 = vunpack.c.h.b16 %v677
      %v874 = vunpack.c.l.b16 %v678
      %v875 = vunpack.c.h.b16 %v678
      %v876 = vunpack.c.l.b16 %v679
      %v877 = vunpack.c.h.b16 %v679
      %v878 = vunpack.c.l.b16 %v680
      %v879 = vunpack.c.h.b16 %v680
      %v880 = vunpack.c.l.b16 %v681
      %v881 = vunpack.c.h.b16 %v681
      %v882 = vunpack.c.l.b16 %v682
      %v883 = vunpack.c.h.b16 %v682
      %v884 = vunpack.c.l.b16 %v683
      %v885 = vunpack.c.h.b16 %v683
      %v886 = vunpack.c.l.b16 %v684
      %v887 = vunpack.c.h.b16 %v684
      %v888 = vunpack.c.l.b16 %v685
      %v889 = vunpack.c.h.b16 %v685
      %v890 = vunpack.c.l.b16 %v686
      %v891 = vunpack.c.h.b16 %v686
      %v892 = vunpack.c.l.b16 %v687
      %v893 = vunpack.c.h.b16 %v687
      %v894 = vunpack.c.l.b16 %v688
      %v895 = vunpack.c.h.b16 %v688
      %v896 = vunpack.c.l.b16 %v689
      %v897 = vunpack.c.h.b16 %v689
      %v898 = vunpack.c.l.b16 %v690
      %v899 = vunpack.c.h.b16 %v690
      %v900 = vunpack.c.l.b16 %v691
      %v901 = vunpack.c.h.b16 %v691
      %v902 = vunpack.c.l.b16 %v692
      %v903 = vunpack.c.h.b16 %v692
      %v904 = vunpack.c.l.b16 %v693
      %v905 = vunpack.c.h.b16 %v693
      %v906 = vunpack.c.l.b16 %v694
      %v907 = vunpack.c.h.b16 %v694
      %v908 = vunpack.c.l.b16 %v695
      %v909 = vunpack.c.h.b16 %v695
      %v910 = vpack.c.b16 %v786, %v782
      %v911 = vpack.c.b16 %v787, %v783
      %v912 = vpack.c.b16 %v788, %v784
      %v913 = vpack.c.b16 %v789, %v785
      %v914 = vpack.c.b16 %v794, %v790
      %v915 = vpack.c.b16 %v795, %v791
      %v916 = vpack.c.b16 %v796, %v792
      %v917 = vpack.c.b16 %v797, %v793
      %v918 = vpack.c.b16 %v802, %v798
      %v919 = vpack.c.b16 %v803, %v799
      %v920 = vpack.c.b16 %v804, %v800
      %v921 = vpack.c.b16 %v805, %v801
      %v922 = vpack.c.b16 %v810, %v806
      %v923 = vpack.c.b16 %v811, %v807
      %v924 = vpack.c.b16 %v812, %v808
      %v925 = vpack.c.b16 %v813, %v809
      %v926 = vpack.c.b16 %v818, %v814
      %v927 = vpack.c.b16 %v819, %v815
      %v928 = vpack.c.b16 %v820, %v816
      %v929 = vpack.c.b16 %v821, %v817
      %v930 = vpack.c.b16 %v826, %v822
      %v931 = vpack.c.b16 %v827, %v823
      %v932 = vpack.c.b16 %v828, %v824
      %v933 = vpack.c.b16 %v829, %v825
      %v934 = vpack.c.b16 %v834, %v830
      %v935 = vpack.c.b16 %v835, %v831
      %v936 = vpack.c.b16 %v836, %v832
      %v937 = vpack.c.b16 %v837, %v833
      %v938 = vpack.c.b16 %v842, %v838
      %v939 = vpack.c.b16 %v843, %v839
      %v940 = vpack.c.b16 %v844, %v840
      %v941 = vpack.c.b16 %v845, %v841
      %v942 = vpack.c.b16 %v850, %v846
      %v943 = vpack.c.b16 %v851, %v847
      %v944 = vpack.c.b16 %v852, %v848
      %v945 = vpack.c.b16 %v853, %v849
      %v946 = vpack.c.b16 %v858, %v854
      %v947 = vpack.c.b16 %v859, %v855
      %v948 = vpack.c.b16 %v860, %v856
      %v949 = vpack.c.b16 %v861, %v857
      %v950 = vpack.c.b16 %v866, %v862
      %v951 = vpack.c.b16 %v867, %v863
      %v952 = vpack.c.b16 %v868, %v864
      %v953 = vpack.c.b16 %v869, %v865
      %v954 = vpack.c.b16 %v874, %v870
      %v955 = vpack.c.b16 %v875, %v871
      %v956 = vpack.c.b16 %v876, %v872
      %v957 = vpack.c.b16 %v877, %v873
      %v958 = vpack.c.b16 %v882, %v878
      %v959 = vpack.c.b16 %v883, %v879
      %v960 = vpack.c.b16 %v884, %v880
      %v961 = vpack.c.b16 %v885, %v881
      %v962 = vpack.c.b16 %v890, %v886
      %v963 = vpack.c.b16 %v891, %v887
      %v964 = vpack.c.b16 %v892, %v888
      %v965 = vpack.c.b16 %v893, %v889
      %v966 = vpack.c.b16 %v898, %v894
      %v967 = vpack.c.b16 %v899, %v895
      %v968 = vpack.c.b16 %v900, %v896
      %v969 = vpack.c.b16 %v901, %v897
      %v970 = vpack.c.b16 %v906, %v902
      %v971 = vpack.c.b16 %v907, %v903
      %v972 = vpack.c.b16 %v908, %v904
      %v973 = vpack.c.b16 %v909, %v905
      %1038 = vmatprep.subr.bf16.mxu0 %v911
      %1039 = vmatpush1.bf16.msra.mxu0 %v910
      %1040 = vmatprep.subr.bf16.mxu0 %v915
      %1041 = vmatpush1.bf16.msra.mxu0 %v914
      %1042 = vmatprep.subr.bf16.mxu0 %v919
      %1043 = vmatpush1.bf16.msra.mxu0 %v918
      %1044 = vmatprep.subr.bf16.mxu0 %v923
      %1045 = vmatpush1.bf16.msra.mxu0 %v922
      %1046 = vmatprep.subr.bf16.mxu0 %v927
      %1047 = vmatpush1.bf16.msra.mxu0 %v926
      %1048 = vmatprep.subr.bf16.mxu0 %v931
      %1049 = vmatpush1.bf16.msra.mxu0 %v930
      %1050 = vmatprep.subr.bf16.mxu0 %v935
      %1051 = vmatpush1.bf16.msra.mxu0 %v934
      %1052 = vmatprep.subr.bf16.mxu0 %v939
      %1053 = vmatpush1.bf16.msra.mxu0 %v938
      %1054 = vmatprep.subr.bf16.mxu0 %v943
      %1055 = vmatpush1.bf16.msra.mxu0 %v942
      %1056 = vmatprep.subr.bf16.mxu0 %v947
      %1057 = vmatpush1.bf16.msra.mxu0 %v946
      %1058 = vmatprep.subr.bf16.mxu0 %v951
      %1059 = vmatpush1.bf16.msra.mxu0 %v950
      %1060 = vmatprep.subr.bf16.mxu0 %v955
      %1061 = vmatpush1.bf16.msra.mxu0 %v954
      %1062 = vmatprep.subr.bf16.mxu0 %v959
      %1063 = vmatpush1.bf16.msra.mxu0 %v958
      %1064 = vmatprep.subr.bf16.mxu0 %v963
      %1065 = vmatpush1.bf16.msra.mxu0 %v962
      %1066 = vmatprep.subr.bf16.mxu0 %v967
      %1067 = vmatpush1.bf16.msra.mxu0 %v966
      %1068 = vmatprep.subr.bf16.mxu0 %v971
      %1069 = vmatpush1.bf16.msra.mxu0 %v970
      %1070 = vmatprep.mubr.bf16.mxu0 %v617
      %1071 = vmatmul.mubr.bf16.gmra.mrb[0].mxu0 %v616
      %v1072 = vpop.f32.mrb[0].mxu0
      %v1073 = vadd.f32 %v701, %v1072
      %v1074 = vpop.f32.mrb[0].mxu0
      %v1075 = vadd.f32 %v705, %v1074
      %v1076 = vpop.f32.mrb[0].mxu0
      %v1077 = vadd.f32 %v701, %v1076
      %v1078 = vpop.f32.mrb[0].mxu0
      %v1079 = vadd.f32 %v705, %v1078
      %1080 = vmatprep.mubr.bf16.mxu0 %v619
      %1081 = vmatmul.mubr.bf16.gmra.mrb[0].mxu0 %v618
      %v1082 = vpop.f32.mrb[0].mxu0
      %v1083 = vadd.f32 %v701, %v1082
      %v1084 = vpop.f32.mrb[0].mxu0
      %v1085 = vadd.f32 %v705, %v1084
      %v1086 = vpop.f32.mrb[0].mxu0
      %v1087 = vadd.f32 %v701, %v1086
      %v1088 = vpop.f32.mrb[0].mxu0
      %v1089 = vadd.f32 %v705, %v1088
      %1090 = vmatprep.mubr.bf16.mxu0 %v621
      %1091 = vmatmul.mubr.bf16.gmra.mrb[0].mxu0 %v620
      %v1092 = vpop.f32.mrb[0].mxu0
      %v1093 = vadd.f32 %v701, %v1092
      %v1094 = vpop.f32.mrb[0].mxu0
      %v1095 = vadd.f32 %v705, %v1094
      %v1096 = vpop.f32.mrb[0].mxu0
      %v1097 = vadd.f32 %v701, %v1096
      %v1098 = vpop.f32.mrb[0].mxu0
      %v1099 = vadd.f32 %v705, %v1098
      %1100 = vmatprep.mubr.bf16.mxu0 %v623
      %1101 = vmatmul.mubr.bf16.gmra.mrb[0].mxu0 %v622
      %v1102 = vpop.f32.mrb[0].mxu0
      %v1103 = vadd.f32 %v701, %v1102
      %v1104 = vpop.f32.mrb[0].mxu0
      %v1105 = vadd.f32 %v705, %v1104
      %v1106 = vpop.f32.mrb[0].mxu0
      %v1107 = vadd.f32 %v701, %v1106
      %v1108 = vpop.f32.mrb[0].mxu0
      %v1109 = vadd.f32 %v705, %v1108
      %1110 = vmatprep.mubr.bf16.mxu0 %v625
      %1111 = vmatmul.mubr.bf16.gmra.mrb[0].mxu0 %v624
      %v1112 = vpop.f32.mrb[0].mxu0
      %v1113 = vadd.f32 %v701, %v1112
      %v1114 = vpop.f32.mrb[0].mxu0
      %v1115 = vadd.f32 %v705, %v1114
      %v1116 = vpop.f32.mrb[0].mxu0
      %v1117 = vadd.f32 %v701, %v1116
      %v1118 = vpop.f32.mrb[0].mxu0
      %v1119 = vadd.f32 %v705, %v1118
      %1120 = vmatprep.mubr.bf16.mxu0 %v627
      %1121 = vmatmul.mubr.bf16.gmra.mrb[0].mxu0 %v626
      %v1122 = vpop.f32.mrb[0].mxu0
      %v1123 = vadd.f32 %v701, %v1122
      %v1124 = vpop.f32.mrb[0].mxu0
      %v1125 = vadd.f32 %v705, %v1124
      %v1126 = vpop.f32.mrb[0].mxu0
      %v1127 = vadd.f32 %v701, %v1126
      %v1128 = vpop.f32.mrb[0].mxu0
      %v1129 = vadd.f32 %v705, %v1128
      %1130 = vmatprep.mubr.bf16.mxu0 %v629
      %1131 = vmatmul.mubr.bf16.gmra.mrb[0].mxu0 %v628
      %v1132 = vpop.f32.mrb[0].mxu0
      %v1133 = vadd.f32 %v701, %v1132
      %v1134 = vpop.f32.mrb[0].mxu0
      %v1135 = vadd.f32 %v705, %v1134
      %v1136 = vpop.f32.mrb[0].mxu0
      %v1137 = vadd.f32 %v701, %v1136
      %v1138 = vpop.f32.mrb[0].mxu0
      %v1139 = vadd.f32 %v705, %v1138
      %1140 = vmatprep.mubr.bf16.mxu0 %v631
      %1141 = vmatmul.mubr.bf16.gmra.mrb[0].mxu0 %v630
      %v1142 = vpop.f32.mrb[0].mxu0
      %v1143 = vadd.f32 %v701, %v1142
      %v1144 = vpop.f32.mrb[0].mxu0
      %v1145 = vadd.f32 %v705, %v1144
      %v1146 = vpop.f32.mrb[0].mxu0
      %v1147 = vadd.f32 %v701, %v1146
      %v1148 = vpop.f32.mrb[0].mxu0
      %v1149 = vadd.f32 %v705, %v1148
      %1150 = vdwg.mxu0
      %1151 = vmatprep.subr.bf16.mxu0 %v913
      %1152 = vmatpush1.bf16.msra.mxu0 %v912
      %1153 = vmatprep.subr.bf16.mxu0 %v917
      %1154 = vmatpush1.bf16.msra.mxu0 %v916
      %1155 = vmatprep.subr.bf16.mxu0 %v921
      %1156 = vmatpush1.bf16.msra.mxu0 %v920
      %1157 = vmatprep.subr.bf16.mxu0 %v925
      %1158 = vmatpush1.bf16.msra.mxu0 %v924
      %1159 = vmatprep.subr.bf16.mxu0 %v929
      %1160 = vmatpush1.bf16.msra.mxu0 %v928
      %1161 = vmatprep.subr.bf16.mxu0 %v933
      %1162 = vmatpush1.bf16.msra.mxu0 %v932
      %1163 = vmatprep.subr.bf16.mxu0 %v937
      %1164 = vmatpush1.bf16.msra.mxu0 %v936
      %1165 = vmatprep.subr.bf16.mxu0 %v941
      %1166 = vmatpush1.bf16.msra.mxu0 %v940
      %1167 = vmatprep.subr.bf16.mxu0 %v945
      %1168 = vmatpush1.bf16.msra.mxu0 %v944
      %1169 = vmatprep.subr.bf16.mxu0 %v949
      %1170 = vmatpush1.bf16.msra.mxu0 %v948
      %1171 = vmatprep.subr.bf16.mxu0 %v953
      %1172 = vmatpush1.bf16.msra.mxu0 %v952
      %1173 = vmatprep.subr.bf16.mxu0 %v957
      %1174 = vmatpush1.bf16.msra.mxu0 %v956
      %1175 = vmatprep.subr.bf16.mxu0 %v961
      %1176 = vmatpush1.bf16.msra.mxu0 %v960
      %1177 = vmatprep.subr.bf16.mxu0 %v965
      %1178 = vmatpush1.bf16.msra.mxu0 %v964
      %1179 = vmatprep.subr.bf16.mxu0 %v969
      %1180 = vmatpush1.bf16.msra.mxu0 %v968
      %1181 = vmatprep.subr.bf16.mxu0 %v973
      %1182 = vmatpush1.bf16.msra.mxu0 %v972
      %1183 = vmatprep.mubr.bf16.mxu0 %v617
      %1184 = vmatmul.mubr.bf16.gmra.mrb[0].mxu0 %v616
      %v1185 = vpop.f32.mrb[0].mxu0
      %v1186 = vadd.f32 %v709, %v1185
      %v1187 = vpop.f32.mrb[0].mxu0
      %v1188 = vadd.f32 %v713, %v1187
      %v1189 = vpop.f32.mrb[0].mxu0
      %v1190 = vadd.f32 %v709, %v1189
      %v1191 = vpop.f32.mrb[0].mxu0
      %v1192 = vadd.f32 %v713, %v1191
      %1193 = vmatprep.mubr.bf16.mxu0 %v619
      %1194 = vmatmul.mubr.bf16.gmra.mrb[0].mxu0 %v618
      %v1195 = vpop.f32.mrb[0].mxu0
      %v1196 = vadd.f32 %v709, %v1195
      %v1197 = vpop.f32.mrb[0].mxu0
      %v1198 = vadd.f32 %v713, %v1197
      %v1199 = vpop.f32.mrb[0].mxu0
      %v1200 = vadd.f32 %v709, %v1199
      %v1201 = vpop.f32.mrb[0].mxu0
      %v1202 = vadd.f32 %v713, %v1201
      %1203 = vmatprep.mubr.bf16.mxu0 %v621
      %1204 = vmatmul.mubr.bf16.gmra.mrb[0].mxu0 %v620
      %v1205 = vpop.f32.mrb[0].mxu0
      %v1206 = vadd.f32 %v709, %v1205
      %v1207 = vpop.f32.mrb[0].mxu0
      %v1208 = vadd.f32 %v713, %v1207
      %v1209 = vpop.f32.mrb[0].mxu0
      %v1210 = vadd.f32 %v709, %v1209
      %v1211 = vpop.f32.mrb[0].mxu0
      %v1212 = vadd.f32 %v713, %v1211
      %1213 = vmatprep.mubr.bf16.mxu0 %v623
      %1214 = vmatmul.mubr.bf16.gmra.mrb[0].mxu0 %v622
      %v1215 = vpop.f32.mrb[0].mxu0
      %v1216 = vadd.f32 %v709, %v1215
      %v1217 = vpop.f32.mrb[0].mxu0
      %v1218 = vadd.f32 %v713, %v1217
      %v1219 = vpop.f32.mrb[0].mxu0
      %v1220 = vadd.f32 %v709, %v1219
      %v1221 = vpop.f32.mrb[0].mxu0
      %v1222 = vadd.f32 %v713, %v1221
      %1223 = vmatprep.mubr.bf16.mxu0 %v625
      %1224 = vmatmul.mubr.bf16.gmra.mrb[0].mxu0 %v624
      %v1225 = vpop.f32.mrb[0].mxu0
      %v1226 = vadd.f32 %v709, %v1225
      %v1227 = vpop.f32.mrb[0].mxu0
      %v1228 = vadd.f32 %v713, %v1227
      %v1229 = vpop.f32.mrb[0].mxu0
      %v1230 = vadd.f32 %v709, %v1229
      %v1231 = vpop.f32.mrb[0].mxu0
      %v1232 = vadd.f32 %v713, %v1231
      %1233 = vmatprep.mubr.bf16.mxu0 %v627
      %1234 = vmatmul.mubr.bf16.gmra.mrb[0].mxu0 %v626
      %v1235 = vpop.f32.mrb[0].mxu0
      %v1236 = vadd.f32 %v709, %v1235
      %v1237 = vpop.f32.mrb[0].mxu0
      %v1238 = vadd.f32 %v713, %v1237
      %v1239 = vpop.f32.mrb[0].mxu0
      %v1240 = vadd.f32 %v709, %v1239
      %v1241 = vpop.f32.mrb[0].mxu0
      %v1242 = vadd.f32 %v713, %v1241
      %1243 = vmatprep.mubr.bf16.mxu0 %v629
      %1244 = vmatmul.mubr.bf16.gmra.mrb[0].mxu0 %v628
      %v1245 = vpop.f32.mrb[0].mxu0
      %v1246 = vadd.f32 %v709, %v1245
      %v1247 = vpop.f32.mrb[0].mxu0
      %v1248 = vadd.f32 %v713, %v1247
      %v1249 = vpop.f32.mrb[0].mxu0
      %v1250 = vadd.f32 %v709, %v1249
      %v1251 = vpop.f32.mrb[0].mxu0
      %v1252 = vadd.f32 %v713, %v1251
      %1253 = vmatprep.mubr.bf16.mxu0 %v631
      %1254 = vmatmul.mubr.bf16.gmra.mrb[0].mxu0 %v630
      %v1255 = vpop.f32.mrb[0].mxu0
      %v1256 = vadd.f32 %v709, %v1255
      %v1257 = vpop.f32.mrb[0].mxu0
      %v1258 = vadd.f32 %v713, %v1257
      %v1259 = vpop.f32.mrb[0].mxu0
      %v1260 = vadd.f32 %v709, %v1259
      %v1261 = vpop.f32.mrb[0].mxu0
      %v1262 = vadd.f32 %v713, %v1261
      %1263 = vdwg.mxu0
      %v1264 = vmax.f32 %v1073, 0.0
      %v1265 = vmax.f32 %v1075, 0.0
      %v1266 = vmax.f32 %v1186, 0.0
      %v1267 = vmax.f32 %v1188, 0.0
      %v1268 = vmax.f32 %v1077, 0.0
      %v1269 = vmax.f32 %v1079, 0.0
      %v1270 = vmax.f32 %v1190, 0.0
      %v1271 = vmax.f32 %v1192, 0.0
      %v1272 = vmax.f32 %v1083, 0.0
      %v1273 = vmax.f32 %v1085, 0.0
      %v1274 = vmax.f32 %v1196, 0.0
      %v1275 = vmax.f32 %v1198, 0.0
      %v1276 = vmax.f32 %v1087, 0.0
      %v1277 = vmax.f32 %v1089, 0.0
      %v1278 = vmax.f32 %v1200, 0.0
      %v1279 = vmax.f32 %v1202, 0.0
      %v1280 = vmax.f32 %v1093, 0.0
      %v1281 = vmax.f32 %v1095, 0.0
      %v1282 = vmax.f32 %v1206, 0.0
      %v1283 = vmax.f32 %v1208, 0.0
      %v1284 = vmax.f32 %v1097, 0.0
      %v1285 = vmax.f32 %v1099, 0.0
      %v1286 = vmax.f32 %v1210, 0.0
      %v1287 = vmax.f32 %v1212, 0.0
      %v1288 = vmax.f32 %v1103, 0.0
      %v1289 = vmax.f32 %v1105, 0.0
      %v1290 = vmax.f32 %v1216, 0.0
      %v1291 = vmax.f32 %v1218, 0.0
      %v1292 = vmax.f32 %v1107, 0.0
      %v1293 = vmax.f32 %v1109, 0.0
      %v1294 = vmax.f32 %v1220, 0.0
      %v1295 = vmax.f32 %v1222, 0.0
      %v1296 = vmax.f32 %v1113, 0.0
      %v1297 = vmax.f32 %v1115, 0.0
      %v1298 = vmax.f32 %v1226, 0.0
      %v1299 = vmax.f32 %v1228, 0.0
      %v1300 = vmax.f32 %v1117, 0.0
      %v1301 = vmax.f32 %v1119, 0.0
      %v1302 = vmax.f32 %v1230, 0.0
      %v1303 = vmax.f32 %v1232, 0.0
      %v1304 = vmax.f32 %v1123, 0.0
      %v1305 = vmax.f32 %v1125, 0.0
      %v1306 = vmax.f32 %v1236, 0.0
      %v1307 = vmax.f32 %v1238, 0.0
      %v1308 = vmax.f32 %v1127, 0.0
      %v1309 = vmax.f32 %v1129, 0.0
      %v1310 = vmax.f32 %v1240, 0.0
      %v1311 = vmax.f32 %v1242, 0.0
      %v1312 = vmax.f32 %v1133, 0.0
      %v1313 = vmax.f32 %v1135, 0.0
      %v1314 = vmax.f32 %v1246, 0.0
      %v1315 = vmax.f32 %v1248, 0.0
      %v1316 = vmax.f32 %v1137, 0.0
      %v1317 = vmax.f32 %v1139, 0.0
      %v1318 = vmax.f32 %v1250, 0.0
      %v1319 = vmax.f32 %v1252, 0.0
      %v1320 = vmax.f32 %v1143, 0.0
      %v1321 = vmax.f32 %v1145, 0.0
      %v1322 = vmax.f32 %v1256, 0.0
      %v1323 = vmax.f32 %v1258, 0.0
      %v1324 = vmax.f32 %v1147, 0.0
      %v1325 = vmax.f32 %v1149, 0.0
      %v1326 = vmax.f32 %v1260, 0.0
      %v1327 = vmax.f32 %v1262, 0.0
      %v1328 = vld [vmem:[%s5] sm:$0x3]
      %v1330 = vlaneseq
      %v1331 = vshrl.u32 %v1330, 7
      %v1332 = vsub.s32 0, %v1331
      %v1333 = vrot.slane %v1328, %v1332
      %v1334 = vlaneseq
      %v1335 = vshrl.u32 %v1334, 7
      %v1336 = vsub.s32 1, %v1335
      %v1337 = vrot.slane %v1328, %v1336
      %v1340 = vmul.f32 %v1264, %v1333
      %v1341 = vmul.f32 %v1265, %v1337
      %v1342 = vmul.f32 %v1268, %v1333
      %v1343 = vmul.f32 %v1269, %v1337
      %v1344 = vmul.f32 %v1272, %v1333
      %v1345 = vmul.f32 %v1273, %v1337
      %v1346 = vmul.f32 %v1276, %v1333
      %v1347 = vmul.f32 %v1277, %v1337
      %v1348 = vmul.f32 %v1280, %v1333
      %v1349 = vmul.f32 %v1281, %v1337
      %v1350 = vmul.f32 %v1284, %v1333
      %v1351 = vmul.f32 %v1285, %v1337
      %v1352 = vmul.f32 %v1288, %v1333
      %v1353 = vmul.f32 %v1289, %v1337
      %v1354 = vmul.f32 %v1292, %v1333
      %v1355 = vmul.f32 %v1293, %v1337
      %v1356 = vmul.f32 %v1296, %v1333
      %v1357 = vmul.f32 %v1297, %v1337
      %v1358 = vmul.f32 %v1300, %v1333
      %v1359 = vmul.f32 %v1301, %v1337
      %v1360 = vmul.f32 %v1304, %v1333
      %v1361 = vmul.f32 %v1305, %v1337
      %v1362 = vmul.f32 %v1308, %v1333
      %v1363 = vmul.f32 %v1309, %v1337
      %v1364 = vmul.f32 %v1312, %v1333
      %v1365 = vmul.f32 %v1313, %v1337
      %v1366 = vmul.f32 %v1316, %v1333
      %v1367 = vmul.f32 %v1317, %v1337
      %v1368 = vmul.f32 %v1320, %v1333
      %v1369 = vmul.f32 %v1321, %v1337
      %v1370 = vmul.f32 %v1324, %v1333
      %v1371 = vmul.f32 %v1325, %v1337
      %v1372 = vadd.f32 %v1340, %v1341
      %1373 = vadd.xlane.f32.xlu0 %v1372
      %v1374 = vpop.xlane.xlu0 %1373
      %v1375 = vadd.f32 %v1342, %v1343
      %1376 = vadd.xlane.f32.xlu0 %v1375
      %v1377 = vpop.xlane.xlu0 %1376
      %v1378 = vadd.f32 %v1344, %v1345
      %1379 = vadd.xlane.f32.xlu0 %v1378
      %v1380 = vpop.xlane.xlu0 %1379
      %v1381 = vadd.f32 %v1346, %v1347
      %1382 = vadd.xlane.f32.xlu0 %v1381
      %v1383 = vpop.xlane.xlu0 %1382
      %v1384 = vadd.f32 %v1348, %v1349
      %1385 = vadd.xlane.f32.xlu0 %v1384
      %v1386 = vpop.xlane.xlu0 %1385
      %v1387 = vadd.f32 %v1350, %v1351
      %1388 = vadd.xlane.f32.xlu0 %v1387
      %v1389 = vpop.xlane.xlu0 %1388
      %v1390 = vadd.f32 %v1352, %v1353
      %1391 = vadd.xlane.f32.xlu0 %v1390
      %v1392 = vpop.xlane.xlu0 %1391
      %v1393 = vadd.f32 %v1354, %v1355
      %1394 = vadd.xlane.f32.xlu0 %v1393
      %v1395 = vpop.xlane.xlu0 %1394
      %v1396 = vadd.f32 %v1356, %v1357
      %1397 = vadd.xlane.f32.xlu0 %v1396
      %v1398 = vpop.xlane.xlu0 %1397
      %v1399 = vadd.f32 %v1358, %v1359
      %1400 = vadd.xlane.f32.xlu0 %v1399
      %v1401 = vpop.xlane.xlu0 %1400
      %v1402 = vadd.f32 %v1360, %v1361
      %1403 = vadd.xlane.f32.xlu0 %v1402
      %v1404 = vpop.xlane.xlu0 %1403
      %v1405 = vadd.f32 %v1362, %v1363
      %1406 = vadd.xlane.f32.xlu0 %v1405
      %v1407 = vpop.xlane.xlu0 %1406
      %v1408 = vadd.f32 %v1364, %v1365
      %1409 = vadd.xlane.f32.xlu0 %v1408
      %v1410 = vpop.xlane.xlu0 %1409
      %v1411 = vadd.f32 %v1366, %v1367
      %1412 = vadd.xlane.f32.xlu0 %v1411
      %v1413 = vpop.xlane.xlu0 %1412
      %v1414 = vadd.f32 %v1368, %v1369
      %1415 = vadd.xlane.f32.xlu0 %v1414
      %v1416 = vpop.xlane.xlu0 %1415
      %v1417 = vadd.f32 %v1370, %v1371
      %1418 = vadd.xlane.f32.xlu0 %v1417
      %v1419 = vpop.xlane.xlu0 %1418
      %v1420 = vld [vmem:[#allocation2] sm:$0x1]
      %v1422 = vlaneseq
      %v1423 = vshrl.u32 %v1422, 7
      %v1424 = vsub.s32 0, %v1423
      %v1425 = vrot.slane %v1420, %v1424
      %v1427 = vadd.f32 %v1374, %v1425
      %v1428 = vadd.f32 %v1377, %v1425
      %v1429 = vadd.f32 %v1380, %v1425
      %v1430 = vadd.f32 %v1383, %v1425
      %v1431 = vadd.f32 %v1386, %v1425
      %v1432 = vadd.f32 %v1389, %v1425
      %v1433 = vadd.f32 %v1392, %v1425
      %v1434 = vadd.f32 %v1395, %v1425
      %v1435 = vadd.f32 %v1398, %v1425
      %v1436 = vadd.f32 %v1401, %v1425
      %v1437 = vadd.f32 %v1404, %v1425
      %v1438 = vadd.f32 %v1407, %v1425
      %v1439 = vadd.f32 %v1410, %v1425
      %v1440 = vadd.f32 %v1413, %v1425
      %v1441 = vadd.f32 %v1416, %v1425
      %v1442 = vadd.f32 %v1419, %v1425
      %v1443 = vpack.c.bf16 %v1270, %v1266
      %v1444 = vpack.c.bf16 %v1271, %v1267
      %v1445 = vpack.c.bf16 %v1278, %v1274
      %v1446 = vpack.c.bf16 %v1279, %v1275
      %v1447 = vpack.c.bf16 %v1286, %v1282
      %v1448 = vpack.c.bf16 %v1287, %v1283
      %v1449 = vpack.c.bf16 %v1294, %v1290
      %v1450 = vpack.c.bf16 %v1295, %v1291
      %v1451 = vpack.c.bf16 %v1302, %v1298
      %v1452 = vpack.c.bf16 %v1303, %v1299
      %v1453 = vpack.c.bf16 %v1310, %v1306
      %v1454 = vpack.c.bf16 %v1311, %v1307
      %v1455 = vpack.c.bf16 %v1318, %v1314
      %v1456 = vpack.c.bf16 %v1319, %v1315
      %v1457 = vpack.c.bf16 %v1326, %v1322
      %v1458 = vpack.c.bf16 %v1327, %v1323
      %v1459 = vld [vmem:[%s7] sm:$0xf]
      %v1460 = vld [vmem:[%s7 + $0x4] sm:$0xf]
      %v1461 = vld [vmem:[%s7 + $0x8] sm:$0xf]
      %v1462 = vld [vmem:[%s7 + $0xc] sm:$0xf]
      %v1463 = vld [vmem:[%s7 + $0x10] sm:$0xf]
      %v1464 = vld [vmem:[%s7 + $0x14] sm:$0xf]
      %v1465 = vld [vmem:[%s7 + $0x18] sm:$0xf]
      %v1466 = vld [vmem:[%s7 + $0x1c] sm:$0xf]
      %v1467 = vld [vmem:[%s7 + $0x20] sm:$0xf]
      %v1468 = vld [vmem:[%s7 + $0x24] sm:$0xf]
      %v1469 = vld [vmem:[%s7 + $0x28] sm:$0xf]
      %v1470 = vld [vmem:[%s7 + $0x2c] sm:$0xf]
      %v1471 = vld [vmem:[%s7 + $0x30] sm:$0xf]
      %v1472 = vld [vmem:[%s7 + $0x34] sm:$0xf]
      %v1473 = vld [vmem:[%s7 + $0x38] sm:$0xf]
      %v1474 = vld [vmem:[%s7 + $0x3c] sm:$0xf]
      %v1475 = vld [vmem:[%s7 + $0x40] sm:$0xf]
      %v1476 = vld [vmem:[%s7 + $0x44] sm:$0xf]
      %v1477 = vld [vmem:[%s7 + $0x48] sm:$0xf]
      %v1478 = vld [vmem:[%s7 + $0x4c] sm:$0xf]
      %v1479 = vld [vmem:[%s7 + $0x50] sm:$0xf]
      %v1480 = vld [vmem:[%s7 + $0x54] sm:$0xf]
      %v1481 = vld [vmem:[%s7 + $0x58] sm:$0xf]
      %v1482 = vld [vmem:[%s7 + $0x5c] sm:$0xf]
      %v1483 = vld [vmem:[%s7 + $0x60] sm:$0xf]
      %v1484 = vld [vmem:[%s7 + $0x64] sm:$0xf]
      %v1485 = vld [vmem:[%s7 + $0x68] sm:$0xf]
      %v1486 = vld [vmem:[%s7 + $0x6c] sm:$0xf]
      %v1487 = vld [vmem:[%s7 + $0x70] sm:$0xf]
      %v1488 = vld [vmem:[%s7 + $0x74] sm:$0xf]
      %v1489 = vld [vmem:[%s7 + $0x78] sm:$0xf]
      %v1490 = vld [vmem:[%s7 + $0x7c] sm:$0xf]
      %v1491 = vld [vmem:[%s8] sm:$0x1]
      %v1493 = vlaneseq
      %v1494 = vshrl.u32 %v1493, 7
      %v1495 = vsub.s32 0, %v1494
      %v1496 = vrot.slane %v1491, %v1495
      %v1530 = vunpack.c.l.b16 %v1459
      %v1531 = vunpack.c.l.b16 %v1460
      %v1532 = vunpack.c.l.b16 %v1461
      %v1533 = vunpack.c.l.b16 %v1462
      %v1534 = vunpack.c.l.b16 %v1463
      %v1535 = vunpack.c.l.b16 %v1464
      %v1536 = vunpack.c.l.b16 %v1465
      %v1537 = vunpack.c.l.b16 %v1466
      %v1538 = vunpack.c.l.b16 %v1467
      %v1539 = vunpack.c.l.b16 %v1468
      %v1540 = vunpack.c.l.b16 %v1469
      %v1541 = vunpack.c.l.b16 %v1470
      %v1542 = vunpack.c.l.b16 %v1471
      %v1543 = vunpack.c.l.b16 %v1472
      %v1544 = vunpack.c.l.b16 %v1473
      %v1545 = vunpack.c.l.b16 %v1474
      %v1546 = vunpack.c.l.b16 %v1475
      %v1547 = vunpack.c.l.b16 %v1476
      %v1548 = vunpack.c.l.b16 %v1477
      %v1549 = vunpack.c.l.b16 %v1478
      %v1550 = vunpack.c.l.b16 %v1479
      %v1551 = vunpack.c.l.b16 %v1480
      %v1552 = vunpack.c.l.b16 %v1481
      %v1553 = vunpack.c.l.b16 %v1482
      %v1554 = vunpack.c.l.b16 %v1483
      %v1555 = vunpack.c.l.b16 %v1484
      %v1556 = vunpack.c.l.b16 %v1485
      %v1557 = vunpack.c.l.b16 %v1486
      %v1558 = vunpack.c.l.b16 %v1487
      %v1559 = vunpack.c.l.b16 %v1488
      %v1560 = vunpack.c.l.b16 %v1489
      %v1561 = vunpack.c.l.b16 %v1490
      %v1562 = vpack.c.b16 %v1531, %v1530
      %v1563 = vpack.c.b16 %v1533, %v1532
      %v1564 = vpack.c.b16 %v1535, %v1534
      %v1565 = vpack.c.b16 %v1537, %v1536
      %v1566 = vpack.c.b16 %v1539, %v1538
      %v1567 = vpack.c.b16 %v1541, %v1540
      %v1568 = vpack.c.b16 %v1543, %v1542
      %v1569 = vpack.c.b16 %v1545, %v1544
      %v1570 = vpack.c.b16 %v1547, %v1546
      %v1571 = vpack.c.b16 %v1549, %v1548
      %v1572 = vpack.c.b16 %v1551, %v1550
      %v1573 = vpack.c.b16 %v1553, %v1552
      %v1574 = vpack.c.b16 %v1555, %v1554
      %v1575 = vpack.c.b16 %v1557, %v1556
      %v1576 = vpack.c.b16 %v1559, %v1558
      %v1577 = vpack.c.b16 %v1561, %v1560
      %1594 = vmatprep.subr.bf16.mxu0 0
      %1595 = vmatpush1.bf16.msra.mxu0 %v1562
      %1596 = vmatprep.subr.bf16.mxu0 0
      %1597 = vmatpush1.bf16.msra.mxu0 %v1563
      %1598 = vmatprep.subr.bf16.mxu0 0
      %1599 = vmatpush1.bf16.msra.mxu0 %v1564
      %1600 = vmatprep.subr.bf16.mxu0 0
      %1601 = vmatpush1.bf16.msra.mxu0 %v1565
      %1602 = vmatprep.subr.bf16.mxu0 0
      %1603 = vmatpush1.bf16.msra.mxu0 %v1566
      %1604 = vmatprep.subr.bf16.mxu0 0
      %1605 = vmatpush1.bf16.msra.mxu0 %v1567
      %1606 = vmatprep.subr.bf16.mxu0 0
      %1607 = vmatpush1.bf16.msra.mxu0 %v1568
      %1608 = vmatprep.subr.bf16.mxu0 0
      %1609 = vmatpush1.bf16.msra.mxu0 %v1569
      %1610 = vmatprep.subr.bf16.mxu0 0
      %1611 = vmatpush1.bf16.msra.mxu0 %v1570
      %1612 = vmatprep.subr.bf16.mxu0 0
      %1613 = vmatpush1.bf16.msra.mxu0 %v1571
      %1614 = vmatprep.subr.bf16.mxu0 0
      %1615 = vmatpush1.bf16.msra.mxu0 %v1572
      %1616 = vmatprep.subr.bf16.mxu0 0
      %1617 = vmatpush1.bf16.msra.mxu0 %v1573
      %1618 = vmatprep.subr.bf16.mxu0 0
      %1619 = vmatpush1.bf16.msra.mxu0 %v1574
      %1620 = vmatprep.subr.bf16.mxu0 0
      %1621 = vmatpush1.bf16.msra.mxu0 %v1575
      %1622 = vmatprep.subr.bf16.mxu0 0
      %1623 = vmatpush1.bf16.msra.mxu0 %v1576
      %1624 = vmatprep.subr.bf16.mxu0 0
      %1625 = vmatpush1.bf16.msra.mxu0 %v1577
      %1626 = vmatprep.mubr.bf16.mxu0 %v1444
      %1627 = vmatmul.mubr.bf16.gmra.mrb[0].mxu0 %v1443
      %v1628 = vpop.f32.mrb[0].mxu0
      %v1629 = vadd.f32 %v1496, %v1628
      %v1630 = vpop.f32.mrb[0].mxu0
      %v1631 = vpop.f32.mrb[0].mxu0
      %v1632 = vadd.f32 %v1496, %v1631
      %v1633 = vpop.f32.mrb[0].mxu0
      %1634 = vmatprep.mubr.bf16.mxu0 %v1446
      %1635 = vmatmul.mubr.bf16.gmra.mrb[0].mxu0 %v1445
      %v1636 = vpop.f32.mrb[0].mxu0
      %v1637 = vadd.f32 %v1496, %v1636
      %v1638 = vpop.f32.mrb[0].mxu0
      %v1639 = vpop.f32.mrb[0].mxu0
      %v1640 = vadd.f32 %v1496, %v1639
      %v1641 = vpop.f32.mrb[0].mxu0
      %1642 = vmatprep.mubr.bf16.mxu0 %v1448
      %1643 = vmatmul.mubr.bf16.gmra.mrb[0].mxu0 %v1447
      %v1644 = vpop.f32.mrb[0].mxu0
      %v1645 = vadd.f32 %v1496, %v1644
      %v1646 = vpop.f32.mrb[0].mxu0
      %v1647 = vpop.f32.mrb[0].mxu0
      %v1648 = vadd.f32 %v1496, %v1647
      %v1649 = vpop.f32.mrb[0].mxu0
      %1650 = vmatprep.mubr.bf16.mxu0 %v1450
      %1651 = vmatmul.mubr.bf16.gmra.mrb[0].mxu0 %v1449
      %v1652 = vpop.f32.mrb[0].mxu0
      %v1653 = vadd.f32 %v1496, %v1652
      %v1654 = vpop.f32.mrb[0].mxu0
      %v1655 = vpop.f32.mrb[0].mxu0
      %v1656 = vadd.f32 %v1496, %v1655
      %v1657 = vpop.f32.mrb[0].mxu0
      %1658 = vmatprep.mubr.bf16.mxu0 %v1452
      %1659 = vmatmul.mubr.bf16.gmra.mrb[0].mxu0 %v1451
      %v1660 = vpop.f32.mrb[0].mxu0
      %v1661 = vadd.f32 %v1496, %v1660
      %v1662 = vpop.f32.mrb[0].mxu0
      %v1663 = vpop.f32.mrb[0].mxu0
      %v1664 = vadd.f32 %v1496, %v1663
      %v1665 = vpop.f32.mrb[0].mxu0
      %1666 = vmatprep.mubr.bf16.mxu0 %v1454
      %1667 = vmatmul.mubr.bf16.gmra.mrb[0].mxu0 %v1453
      %v1668 = vpop.f32.mrb[0].mxu0
      %v1669 = vadd.f32 %v1496, %v1668
      %v1670 = vpop.f32.mrb[0].mxu0
      %v1671 = vpop.f32.mrb[0].mxu0
      %v1672 = vadd.f32 %v1496, %v1671
      %v1673 = vpop.f32.mrb[0].mxu0
      %1674 = vmatprep.mubr.bf16.mxu0 %v1456
      %1675 = vmatmul.mubr.bf16.gmra.mrb[0].mxu0 %v1455
      %v1676 = vpop.f32.mrb[0].mxu0
      %v1677 = vadd.f32 %v1496, %v1676
      %v1678 = vpop.f32.mrb[0].mxu0
      %v1679 = vpop.f32.mrb[0].mxu0
      %v1680 = vadd.f32 %v1496, %v1679
      %v1681 = vpop.f32.mrb[0].mxu0
      %1682 = vmatprep.mubr.bf16.mxu0 %v1458
      %1683 = vmatmul.mubr.bf16.gmra.mrb[0].mxu0 %v1457
      %v1684 = vpop.f32.mrb[0].mxu0
      %v1685 = vadd.f32 %v1496, %v1684
      %v1686 = vpop.f32.mrb[0].mxu0
      %v1687 = vpop.f32.mrb[0].mxu0
      %v1688 = vadd.f32 %v1496, %v1687
      %v1689 = vpop.f32.mrb[0].mxu0
      %1690 = vdwg.mxu0
      %1691 = vadd.xlane.f32.xlu0 %v1629
      %v1692 = vpop.xlane.xlu0 %1691
      %1693 = vadd.xlane.f32.xlu0 %v1632
      %v1694 = vpop.xlane.xlu0 %1693
      %1695 = vadd.xlane.f32.xlu0 %v1637
      %v1696 = vpop.xlane.xlu0 %1695
      %1697 = vadd.xlane.f32.xlu0 %v1640
      %v1698 = vpop.xlane.xlu0 %1697
      %1699 = vadd.xlane.f32.xlu0 %v1645
      %v1700 = vpop.xlane.xlu0 %1699
      %1701 = vadd.xlane.f32.xlu0 %v1648
      %v1702 = vpop.xlane.xlu0 %1701
      %1703 = vadd.xlane.f32.xlu0 %v1653
      %v1704 = vpop.xlane.xlu0 %1703
      %1705 = vadd.xlane.f32.xlu0 %v1656
      %v1706 = vpop.xlane.xlu0 %1705
      %1707 = vadd.xlane.f32.xlu0 %v1661
      %v1708 = vpop.xlane.xlu0 %1707
      %1709 = vadd.xlane.f32.xlu0 %v1664
      %v1710 = vpop.xlane.xlu0 %1709
      %1711 = vadd.xlane.f32.xlu0 %v1669
      %v1712 = vpop.xlane.xlu0 %1711
      %1713 = vadd.xlane.f32.xlu0 %v1672
      %v1714 = vpop.xlane.xlu0 %1713
      %1715 = vadd.xlane.f32.xlu0 %v1677
      %v1716 = vpop.xlane.xlu0 %1715
      %1717 = vadd.xlane.f32.xlu0 %v1680
      %v1718 = vpop.xlane.xlu0 %1717
      %1719 = vadd.xlane.f32.xlu0 %v1685
      %v1720 = vpop.xlane.xlu0 %1719
      %1721 = vadd.xlane.f32.xlu0 %v1688
      %v1722 = vpop.xlane.xlu0 %1721
      %v1723 = vmul.f32 %v1692, 0.0625
      %v1724 = vmul.f32 %v1694, 0.0625
      %v1725 = vmul.f32 %v1696, 0.0625
      %v1726 = vmul.f32 %v1698, 0.0625
      %v1727 = vmul.f32 %v1700, 0.0625
      %v1728 = vmul.f32 %v1702, 0.0625
      %v1729 = vmul.f32 %v1704, 0.0625
      %v1730 = vmul.f32 %v1706, 0.0625
      %v1731 = vmul.f32 %v1708, 0.0625
      %v1732 = vmul.f32 %v1710, 0.0625
      %v1733 = vmul.f32 %v1712, 0.0625
      %v1734 = vmul.f32 %v1714, 0.0625
      %v1735 = vmul.f32 %v1716, 0.0625
      %v1736 = vmul.f32 %v1718, 0.0625
      %v1737 = vmul.f32 %v1720, 0.0625
      %v1738 = vmul.f32 %v1722, 0.0625
      %1740 = vset.pattern.permute.xlu0 0
      %1741 = vperm.xlu0 %1740, %v1427
      %v1742 = vpop.permute.xlu0 %1741
      %1745 = vset.pattern.permute.xlu0 0
      %1746 = vperm.xlu0 %1745, %v1428
      %v1747 = vpop.permute.xlu0 %1746
      %1750 = vset.pattern.permute.xlu0 0
      %1751 = vperm.xlu0 %1750, %v1429
      %v1752 = vpop.permute.xlu0 %1751
      %1755 = vset.pattern.permute.xlu0 0
      %1756 = vperm.xlu0 %1755, %v1430
      %v1757 = vpop.permute.xlu0 %1756
      %1760 = vset.pattern.permute.xlu0 0
      %1761 = vperm.xlu0 %1760, %v1431
      %v1762 = vpop.permute.xlu0 %1761
      %1765 = vset.pattern.permute.xlu0 0
      %1766 = vperm.xlu0 %1765, %v1432
      %v1767 = vpop.permute.xlu0 %1766
      %1770 = vset.pattern.permute.xlu0 0
      %1771 = vperm.xlu0 %1770, %v1433
      %v1772 = vpop.permute.xlu0 %1771
      %1775 = vset.pattern.permute.xlu0 0
      %1776 = vperm.xlu0 %1775, %v1434
      %v1777 = vpop.permute.xlu0 %1776
      %1780 = vset.pattern.permute.xlu0 0
      %1781 = vperm.xlu0 %1780, %v1435
      %v1782 = vpop.permute.xlu0 %1781
      %1785 = vset.pattern.permute.xlu0 0
      %1786 = vperm.xlu0 %1785, %v1436
      %v1787 = vpop.permute.xlu0 %1786
      %1790 = vset.pattern.permute.xlu0 0
      %1791 = vperm.xlu0 %1790, %v1437
      %v1792 = vpop.permute.xlu0 %1791
      %1795 = vset.pattern.permute.xlu0 0
      %1796 = vperm.xlu0 %1795, %v1438
      %v1797 = vpop.permute.xlu0 %1796
      %1800 = vset.pattern.permute.xlu0 0
      %1801 = vperm.xlu0 %1800, %v1439
      %v1802 = vpop.permute.xlu0 %1801
      %1805 = vset.pattern.permute.xlu0 0
      %1806 = vperm.xlu0 %1805, %v1440
      %v1807 = vpop.permute.xlu0 %1806
      %1810 = vset.pattern.permute.xlu0 0
      %1811 = vperm.xlu0 %1810, %v1441
      %v1812 = vpop.permute.xlu0 %1811
      %1815 = vset.pattern.permute.xlu0 0
      %1816 = vperm.xlu0 %1815, %v1442
      %v1817 = vpop.permute.xlu0 %1816
      %v1819 = vadd.f32 %v1742, %v1629
      %v1820 = vadd.f32 %v1747, %v1632
      %v1821 = vadd.f32 %v1752, %v1637
      %v1822 = vadd.f32 %v1757, %v1640
      %v1823 = vadd.f32 %v1762, %v1645
      %v1824 = vadd.f32 %v1767, %v1648
      %v1825 = vadd.f32 %v1772, %v1653
      %v1826 = vadd.f32 %v1777, %v1656
      %v1827 = vadd.f32 %v1782, %v1661
      %v1828 = vadd.f32 %v1787, %v1664
      %v1829 = vadd.f32 %v1792, %v1669
      %v1830 = vadd.f32 %v1797, %v1672
      %v1831 = vadd.f32 %v1802, %v1677
      %v1832 = vadd.f32 %v1807, %v1680
      %v1833 = vadd.f32 %v1812, %v1685
      %v1834 = vadd.f32 %v1817, %v1688
      %v1835 = vsub.f32 %v1819, %v1723
      %v1836 = vsub.f32 %v1820, %v1724
      %v1837 = vsub.f32 %v1821, %v1725
      %v1838 = vsub.f32 %v1822, %v1726
      %v1839 = vsub.f32 %v1823, %v1727
      %v1840 = vsub.f32 %v1824, %v1728
      %v1841 = vsub.f32 %v1825, %v1729
      %v1842 = vsub.f32 %v1826, %v1730
      %v1843 = vsub.f32 %v1827, %v1731
      %v1844 = vsub.f32 %v1828, %v1732
      %v1845 = vsub.f32 %v1829, %v1733
      %v1846 = vsub.f32 %v1830, %v1734
      %v1847 = vsub.f32 %v1831, %v1735
      %v1848 = vsub.f32 %v1832, %v1736
      %v1849 = vsub.f32 %v1833, %v1737
      %v1850 = vsub.f32 %v1834, %v1738
      %1851 = vst [vmem:[%s336] sm:$0xff] %v1835
      %1852 = vst [vmem:[%s336 + $0x8] sm:$0xff] %v1836
      %1853 = vst [vmem:[%s336 + $0x10] sm:$0xff] %v1837
      %1854 = vst [vmem:[%s336 + $0x18] sm:$0xff] %v1838
      %1855 = vst [vmem:[%s336 + $0x20] sm:$0xff] %v1839
      %1856 = vst [vmem:[%s336 + $0x28] sm:$0xff] %v1840
      %1857 = vst [vmem:[%s336 + $0x30] sm:$0xff] %v1841
      %1858 = vst [vmem:[%s336 + $0x38] sm:$0xff] %v1842
      %1859 = vst [vmem:[%s336 + $0x40] sm:$0xff] %v1843
      %1860 = vst [vmem:[%s336 + $0x48] sm:$0xff] %v1844
      %1861 = vst [vmem:[%s336 + $0x50] sm:$0xff] %v1845
      %1862 = vst [vmem:[%s336 + $0x58] sm:$0xff] %v1846
      %1863 = vst [vmem:[%s336 + $0x60] sm:$0xff] %v1847
      %1864 = vst [vmem:[%s336 + $0x68] sm:$0xff] %v1848
      %1865 = vst [vmem:[%s336 + $0x70] sm:$0xff] %v1849
      %1866 = vst [vmem:[%s336 + $0x78] sm:$0xff] %v1850
      %s1867 = smul.u32 16, %s22
      %p1868 = scmp.lt.s32.totalorder %s1867, 31
      %s1869 = scalar_select %p1868, %s1867, 31
      %s1870 = smul.addr %s1869, 8
      %s1871 = scalar_lea.vmem %s9, %s1870
      // Predicated region
      $region57: #{dqn_forward.1} parent=55 // pred_check
        %p1872 = pneg %p234
      $region58: #{dqn_forward.1} parent=55 // pred_check_branch
        %1874 = sbr.rel (%p1872) target = $region60
      $region59: #{dqn_forward.1} parent=55 // pred_region
        %s1875 = smul.u32 16, %s22
      $region60: #{dqn_forward.1} parent=55 // pred_fallthru
        _
    $region56: #{dqn_forward.1} parent=5 // pred_fallthru
      _
    %p1876 = scmp.le.s32.totalorder 2, %s17
    // Predicated region
    $region61: #{dqn_forward.1} parent=5 // pred_check
      %p1877 = pneg %p1876
    $region62: #{dqn_forward.1} parent=5 // pred_check_branch
      %1879 = sbr.rel (%p1877) target = $region64
    $region63: #{dqn_forward.1} parent=5 // pred_region
      %s1880 = ssub.s32 %s17, 2
      // Predicated region
      $region65: #{dqn_forward.1} parent=63 // pred_check
        %p1881 = pneg %p240
      $region66: #{dqn_forward.1} parent=63 // pred_check_branch
        %1883 = sbr.rel (%p1881) target = $region68
      $region67: #{dqn_forward.1} parent=63 // pred_region
        %s1884 = smul.u32 16, %s23
        %p1885 = scmp.lt.s32.totalorder %s1884, 31
        %s1886 = scalar_select %p1885, %s1884, 31
        %s1887 = smul.addr %s1886, 8
        %s1888 = scalar_lea.vmem %s9, %s1887
      $region68: #{dqn_forward.1} parent=63 // pred_fallthru
        _
    $region64: #{dqn_forward.1} parent=5 // pred_fallthru
      _
  $region6: #{dqn_forward.1} parent=0 // loop_footer
    %s21 = sadd.s32 1, %s17
  $region7: #{dqn_forward.1} parent=0 // loop_footer_branch
    %16 = sbr.rel target = $region3
  $region8: #{dqn_forward.1} parent=0 // loop_exit
    _

</llo_original>
